<compile_context>
chip_gen: v7x
topology: tpu7x:2x2x1
jax: 0.10.0
libtpu: 0.0.40
codegen_flags: <defaults>
</compile_context>

<pallas_src>
import functools
import math

import jax
import jax.numpy as jnp
from jax.experimental import pallas as pl
from jax.experimental.pallas import tpu as pltpu


def _round_up(x, m):
    return ((x + m - 1) // m) * m


# --------------------------------- kernel ----------------------------------- #

def actor_glu_kernel(
    # inputs
    state_ref,
    wi1_ref, bi1_ref, wi2_ref, bi2_ref,
    blk_g_ref, blk_be_ref, blk_w1_ref, blk_b1_ref, blk_w2_ref, blk_b2_ref,
    fng_ref, fnb_ref, fw_ref, fb_ref,
    whead_ref, bhead_ref,
    # output
    out_ref,
    *, num_blocks, num_neurons, hp, std_start, std_end,
):
    H = num_neurons
    Hp = hp
    inv_h = 1.0 / float(H)

    def dot(a, b):
        return jnp.dot(a, b, preferred_element_type=jnp.float32)

    def glu(z):
        # z: (TM, 2*Hp); both halves are 128-lane-aligned plain vreg views.
        return z[:, :Hp] * jax.nn.sigmoid(z[:, Hp:])

    def layernorm(h, gamma, beta):
        # One-pass stats over padded lanes (padding lanes are exactly 0),
        # normalized by the true feature count H.  gamma/beta padding is 0,
        # so padded output lanes stay exactly 0.
        s1 = jnp.sum(h, axis=-1, keepdims=True)
        s2 = jnp.sum(h * h, axis=-1, keepdims=True)
        mu = s1 * inv_h
        var = jnp.maximum(s2 * inv_h - mu * mu, 0.0)
        return (h - mu) * jax.lax.rsqrt(var + 1e-5) * gamma + beta

    x = state_ref[...]

    # initial: Linear -> GLU -> Linear -> GLU
    h = glu(dot(x, wi1_ref[...]) + bi1_ref[...])
    h = glu(dot(h, wi2_ref[...]) + bi2_ref[...])

    # residual GLU blocks (dropout_rate = 0 -> identity).
    # Static unroll is fine for small num_blocks; switch to lax.fori_loop with
    # dynamic blk_*_ref[i] indexing if num_blocks grows (>~8).
    for i in range(num_blocks):
        identity = h
        o = layernorm(h, blk_g_ref[i], blk_be_ref[i])
        o = glu(dot(o, blk_w1_ref[i]) + blk_b1_ref[i])
        o = dot(o, blk_w2_ref[i]) + blk_b2_ref[i]
        h = o + identity

    # final norm + GLU
    h = layernorm(h, fng_ref[...], fnb_ref[...])
    h = glu(dot(h, fw_ref[...]) + fb_ref[...])

    # single fused head matmul -> one lane-dense output slab
    z = dot(h, whead_ref[...]) + bhead_ref[...]
    col = jax.lax.broadcasted_iota(jnp.int32, z.shape, 1)
    is_std = jnp.logical_and(col >= std_start, col < std_end)
    softplus = jnp.log1p(jnp.exp(-jnp.abs(z))) + jnp.maximum(z, 0.0)
    out_ref[...] = jnp.where(is_std, softplus + 1e-6, z)


# ----------------------------- parameter setup ------------------------------ #

def init_linear(key, fan_in, fan_out):
    """PyTorch nn.Linear default init, stored transposed as (in, out)."""
    kw, kb = jax.random.split(key)
    bound = 1.0 / math.sqrt(fan_in)
    w = jax.random.uniform(kw, (fan_in, fan_out), jnp.float32, -bound, bound)
    b = jax.random.uniform(kb, (fan_out,), jnp.float32, -bound, bound)
    return w, b


def make_params(key, state_dim, num_categories, num_continuous_actions,
                num_blocks, num_neurons):
    """Logical (unpadded, PyTorch-equivalent) parameters."""
    H = num_neurons
    n_keys = 3 + 2 * num_blocks + len(num_categories) + 2 * num_continuous_actions
    keys = iter(jax.random.split(key, n_keys))

    wi1, bi1 = init_linear(next(keys), state_dim, 2 * H)
    wi2, bi2 = init_linear(next(keys), H, 2 * H)

    blk_g, blk_be, blk_w1, blk_b1, blk_w2, blk_b2 = [], [], [], [], [], []
    for _ in range(num_blocks):
        w1, b1 = init_linear(next(keys), H, 2 * H)
        w2, b2 = init_linear(next(keys), H, H)
        blk_g.append(jnp.ones((H,), jnp.float32))
        blk_be.append(jnp.zeros((H,), jnp.float32))
        blk_w1.append(w1); blk_b1.append(b1)
        blk_w2.append(w2); blk_b2.append(b2)

    fng = jnp.ones((H,), jnp.float32)
    fnb = jnp.zeros((H,), jnp.float32)
    fw, fb = init_linear(next(keys), H, 2 * H)

    cat_ws, cat_bs = [], []
    for n in num_categories:
        w, b = init_linear(next(keys), H, n)
        cat_ws.append(w); cat_bs.append(b)

    mean_ws, mean_bs, std_ws, std_bs = [], [], [], []
    for _ in range(num_continuous_actions):
        w, b = init_linear(next(keys), H, 1)
        mean_ws.append(w); mean_bs.append(b)
    for _ in range(num_continuous_actions):
        w, b = init_linear(next(keys), H, 1)
        std_ws.append(w); std_bs.append(b)

    return dict(
        wi1=wi1, bi1=bi1, wi2=wi2, bi2=bi2,
        blk_g=jnp.stack(blk_g), blk_be=jnp.stack(blk_be),
        blk_w1=jnp.stack(blk_w1), blk_b1=jnp.stack(blk_b1),
        blk_w2=jnp.stack(blk_w2), blk_b2=jnp.stack(blk_b2),
        fng=fng, fnb=fnb, fw=fw, fb=fb,
        cat_ws=cat_ws, cat_bs=cat_bs,
        mean_ws=mean_ws, mean_bs=mean_bs,
        std_ws=std_ws, std_bs=std_bs,
    )


def pack_params(p, state_dim, num_categories, num_continuous_actions,
                num_blocks, num_neurons):
    """Pad / re-layout logical params into the lane-aligned kernel layout."""
    H = num_neurons
    Hp = _round_up(H, 128)
    C = num_continuous_actions
    csum = sum(num_categories)
    NH = csum + 2 * C
    NHp = _round_up(NH, 128)

    def pad_glu(w, b, in_p):
        # (in, 2H) GLU linear -> (in_p, 2*Hp): 'a' half at cols [0, H),
        # gate half at cols [Hp, Hp + H); padding is zero.
        fan_in = w.shape[0]
        wp = jnp.zeros((in_p, 2 * Hp), jnp.float32)
        wp = wp.at[:fan_in, :H].set(w[:, :H]).at[:fan_in, Hp:Hp + H].set(w[:, H:])
        bp = jnp.zeros((1, 2 * Hp), jnp.float32)
        bp = bp.at[0, :H].set(b[:H]).at[0, Hp:Hp + H].set(b[H:])
        return wp, bp

    def pad_lin(w, b, in_p, out_p):
        fi, fo = w.shape
        wp = jnp.zeros((in_p, out_p), jnp.float32).at[:fi, :fo].set(w)
        bp = jnp.zeros((1, out_p), jnp.float32).at[0, :fo].set(b)
        return wp, bp

    def pad_vec(v, out_p):
        return jnp.zeros((1, out_p), jnp.float32).at[0, :v.shape[0]].set(v)

    wi1, bi1 = pad_glu(p["wi1"], p["bi1"], state_dim)
    wi2, bi2 = pad_glu(p["wi2"], p["bi2"], Hp)

    blk_g = jnp.stack([pad_vec(p["blk_g"][i], Hp) for i in range(num_blocks)])
    blk_be = jnp.stack([pad_vec(p["blk_be"][i], Hp) for i in range(num_blocks)])
    w1s, b1s, w2s, b2s = [], [], [], []
    for i in range(num_blocks):
        w1, b1 = pad_glu(p["blk_w1"][i], p["blk_b1"][i], Hp)
        w2, b2 = pad_lin(p["blk_w2"][i], p["blk_b2"][i], Hp, Hp)
        w1s.append(w1); b1s.append(b1); w2s.append(w2); b2s.append(b2)
    blk_w1 = jnp.stack(w1s); blk_b1 = jnp.stack(b1s)
    blk_w2 = jnp.stack(w2s); blk_b2 = jnp.stack(b2s)

    fng = pad_vec(p["fng"], Hp)
    fnb = pad_vec(p["fnb"], Hp)
    fw, fb = pad_glu(p["fw"], p["fb"], Hp)

    # fused head: [categorical heads | continuous means | continuous stds]
    whead = jnp.concatenate(p["cat_ws"] + p["mean_ws"] + p["std_ws"], axis=1)
    bhead = jnp.concatenate(p["cat_bs"] + p["mean_bs"] + p["std_bs"], axis=0)
    whead, bhead = pad_lin(whead, bhead, Hp, NHp)

    return (wi1, bi1, wi2, bi2,
            blk_g, blk_be, blk_w1, blk_b1, blk_w2, blk_b2,
            fng, fnb, fw, fb, whead, bhead)


# -------------------------------- wrapper ------------------------------------ #

def actor_glu_normal_forward(state, packed, num_categories,
                             num_continuous_actions, num_blocks, num_neurons):
    B, state_dim = state.shape
    H = num_neurons
    Hp = _round_up(H, 128)
    C = num_continuous_actions
    csum = sum(num_categories)
    NH = csum + 2 * C
    NHp = _round_up(NH, 128)

    # Batch tiling: up to 256 rows per grid step (fills the MXU on v6e/v7x).
    # Padded rows are sliced off after the call.
    TM = min(256, _round_up(B, 8))
    Bp = _round_up(B, TM)
    xs = state if Bp == B else jnp.pad(state, ((0, Bp - B), (0, 0)))

    kernel = functools.partial(
        actor_glu_kernel, num_blocks=num_blocks, num_neurons=H, hp=Hp,
        std_start=csum + C, std_end=csum + 2 * C)

    def resident(a):
        # Full-array block with constant index_map: fetched once, stays in VMEM.
        nd = a.ndim
        return pl.BlockSpec(a.shape, lambda i, _nd=nd: (0,) * _nd)

    in_specs = [pl.BlockSpec((TM, state_dim), lambda i: (i, 0))]
    in_specs += [resident(a) for a in packed]

    out = pl.pallas_call(
        kernel,
        out_shape=jax.ShapeDtypeStruct((Bp, NHp), jnp.float32),
        grid_spec=pltpu.PrefetchScalarGridSpec(
            num_scalar_prefetch=0,
            grid=(Bp // TM,),
            in_specs=in_specs,
            out_specs=pl.BlockSpec((TM, NHp), lambda i: (i, 0)),
        ),
        compiler_params=pltpu.CompilerParams(
            dimension_semantics=("parallel",)),
    )(xs, *packed)

    out = out[:B]

    # split the lane-dense slab back into per-head views (pure glue)
    cat_logits = []
    off = 0
    for n in num_categories:
        cat_logits.append(out[:, off:off + n])
        off += n
    means = [out[:, csum + c: csum + c + 1] for c in range(C)]
    stds = [out[:, csum + C + c: csum + C + c + 1] for c in range(C)]
    return cat_logits, means, stds


# -------------------------- pure-JAX reference ------------------------------- #

def reference_forward(state, p, num_categories, num_continuous_actions,
                      num_blocks, num_neurons):
    H = num_neurons

    def glu(z):
        return z[:, :H] * jax.nn.sigmoid(z[:, H:])

    def ln(x, g, b):
        mu = jnp.mean(x, axis=-1, keepdims=True)
        var = jnp.mean((x - mu) ** 2, axis=-1, keepdims=True)
        return (x - mu) / jnp.sqrt(var + 1e-5) * g + b

    x = glu(state @ p["wi1"] + p["bi1"])
    x = glu(x @ p["wi2"] + p["bi2"])
    for i in range(num_blocks):
        identity = x
        o = ln(x, p["blk_g"][i], p["blk_be"][i])
        o = glu(o @ p["blk_w1"][i] + p["blk_b1"][i])
        o = o @ p["blk_w2"][i] + p["blk_b2"][i]
        x = o + identity
    x = glu(ln(x, p["fng"], p["fnb"]) @ p["fw"] + p["fb"])

    cat_logits = [x @ w + b for w, b in zip(p["cat_ws"], p["cat_bs"])]
    means = [x @ w + b for w, b in zip(p["mean_ws"], p["mean_bs"])]
    stds = [jax.nn.softplus(x @ w + b) + 1e-6
            for w, b in zip(p["std_ws"], p["std_bs"])]
    return cat_logits, means, stds


# --------------------------------- main -------------------------------------- #

if __name__ == "__main__":
    B = 2
    state_dim = 8
    num_categories = [3, 5]
    num_continuous_actions = 2
    num_blocks = 2
    num_neurons = 32

    key = jax.random.PRNGKey(0)
    k_params, k_state = jax.random.split(key)

    logical = make_params(k_params, state_dim, num_categories,
                          num_continuous_actions, num_blocks, num_neurons)
    packed = pack_params(logical, state_dim, num_categories,
                         num_continuous_actions, num_blocks, num_neurons)
    state = jax.random.normal(k_state, (B, state_dim), jnp.float32)

    cat_logits, cont_means, cont_stds = actor_glu_normal_forward(
        state, packed, num_categories, num_continuous_actions,
        num_blocks, num_neurons)

    jax.block_until_ready(cat_logits)
    jax.block_until_ready(cont_means)
    jax.block_until_ready(cont_stds)

    # shape sanity
    assert [t.shape for t in cat_logits] == [(B, n) for n in num_categories]
    assert all(t.shape == (B, 1) for t in cont_means)
    assert all(t.shape == (B, 1) for t in cont_stds)
    assert all(bool(jnp.all(t > 0)) for t in cont_stds)  # softplus + 1e-6 > 0

    # numerical check against a pure-JAX reference of the PyTorch module
    ref_cat, ref_means, ref_stds = reference_forward(
        state, logical, num_categories, num_continuous_actions,
        num_blocks, num_neurons)
    for got, ref in zip(cat_logits + cont_means + cont_stds,
                        ref_cat + ref_means + ref_stds):
        assert bool(jnp.allclose(got, ref, atol=2e-3, rtol=2e-3)), (
            "mismatch, max abs diff = "
            f"{float(jnp.max(jnp.abs(got - ref)))}")

    print("KERNEL_OK")
</pallas_src>

<mosaic_0001>
module attributes {stable_mosaic.version = 11 : i64} {
  func.func @actor_glu_kernel(%arg0: i32, %arg1: memref<8x8xf32, #tpu.memory_space<vmem>>, %arg2: memref<8x256xf32, #tpu.memory_space<vmem>>, %arg3: memref<1x256xf32, #tpu.memory_space<vmem>>, %arg4: memref<128x256xf32, #tpu.memory_space<vmem>>, %arg5: memref<1x256xf32, #tpu.memory_space<vmem>>, %arg6: memref<2x1x128xf32, #tpu.memory_space<vmem>>, %arg7: memref<2x1x128xf32, #tpu.memory_space<vmem>>, %arg8: memref<2x128x256xf32, #tpu.memory_space<vmem>>, %arg9: memref<2x1x256xf32, #tpu.memory_space<vmem>>, %arg10: memref<2x128x128xf32, #tpu.memory_space<vmem>>, %arg11: memref<2x1x128xf32, #tpu.memory_space<vmem>>, %arg12: memref<1x128xf32, #tpu.memory_space<vmem>>, %arg13: memref<1x128xf32, #tpu.memory_space<vmem>>, %arg14: memref<128x256xf32, #tpu.memory_space<vmem>>, %arg15: memref<1x256xf32, #tpu.memory_space<vmem>>, %arg16: memref<128x128xf32, #tpu.memory_space<vmem>>, %arg17: memref<1x128xf32, #tpu.memory_space<vmem>>, %arg18: memref<8x128xf32, #tpu.memory_space<vmem>>) attributes {dimension_semantics = [#tpu.dimension_semantics<parallel>], iteration_bounds = array<i64: 1>, scalar_prefetch = 0 : i64, scratch_operands = 0 : i64, tpu.core_type = #tpu.core_type<tc>, window_params = [{transform_indices = @transform_0, window_bounds = array<i64: 8, 8>}, {pipeline_mode = #tpu.pipeline_mode<synchronous>, transform_indices = @transform_1, window_bounds = array<i64: 8, 256>}, {pipeline_mode = #tpu.pipeline_mode<synchronous>, transform_indices = @transform_2, window_bounds = array<i64: 1, 256>}, {pipeline_mode = #tpu.pipeline_mode<synchronous>, transform_indices = @transform_3, window_bounds = array<i64: 128, 256>}, {pipeline_mode = #tpu.pipeline_mode<synchronous>, transform_indices = @transform_4, window_bounds = array<i64: 1, 256>}, {pipeline_mode = #tpu.pipeline_mode<synchronous>, transform_indices = @transform_5, window_bounds = array<i64: 2, 1, 128>}, {pipeline_mode = #tpu.pipeline_mode<synchronous>, transform_indices = @transform_6, window_bounds = array<i64: 2, 1, 128>}, {pipeline_mode = #tpu.pipeline_mode<synchronous>, transform_indices = @transform_7, window_bounds = array<i64: 2, 128, 256>}, {pipeline_mode = #tpu.pipeline_mode<synchronous>, transform_indices = @transform_8, window_bounds = array<i64: 2, 1, 256>}, {pipeline_mode = #tpu.pipeline_mode<synchronous>, transform_indices = @transform_9, window_bounds = array<i64: 2, 128, 128>}, {pipeline_mode = #tpu.pipeline_mode<synchronous>, transform_indices = @transform_10, window_bounds = array<i64: 2, 1, 128>}, {pipeline_mode = #tpu.pipeline_mode<synchronous>, transform_indices = @transform_11, window_bounds = array<i64: 1, 128>}, {pipeline_mode = #tpu.pipeline_mode<synchronous>, transform_indices = @transform_12, window_bounds = array<i64: 1, 128>}, {pipeline_mode = #tpu.pipeline_mode<synchronous>, transform_indices = @transform_13, window_bounds = array<i64: 128, 256>}, {pipeline_mode = #tpu.pipeline_mode<synchronous>, transform_indices = @transform_14, window_bounds = array<i64: 1, 256>}, {pipeline_mode = #tpu.pipeline_mode<synchronous>, transform_indices = @transform_15, window_bounds = array<i64: 128, 128>}, {pipeline_mode = #tpu.pipeline_mode<synchronous>, transform_indices = @transform_16, window_bounds = array<i64: 1, 128>}, {transform_indices = @transform_17, window_bounds = array<i64: 8, 128>}]} {
    %c0 = arith.constant 0 : index
    %c0_0 = arith.constant 0 : index
    %0 = vector.load %arg1[%c0, %c0_0] : memref<8x8xf32, #tpu.memory_space<vmem>>, vector<8x8xf32>
    %c0_1 = arith.constant 0 : index
    %c0_2 = arith.constant 0 : index
    %1 = vector.load %arg2[%c0_1, %c0_2] : memref<8x256xf32, #tpu.memory_space<vmem>>, vector<8x256xf32>
    %cst = arith.constant dense<0.000000e+00> : vector<8x256xf32>
    %2 = tpu.matmul %0, %1, %cst {dimension_numbers = #tpu.dot_dimension_numbers<[1], [0], [0], [1], [0, 0, 1, 1], [], []>} : vector<8x8xf32>, vector<8x256xf32>, vector<8x256xf32> -> vector<8x256xf32>
    %c0_3 = arith.constant 0 : index
    %c0_4 = arith.constant 0 : index
    %3 = vector.load %arg3[%c0_3, %c0_4] : memref<1x256xf32, #tpu.memory_space<vmem>>, vector<1x256xf32>
    %4 = vector.broadcast %3 : vector<1x256xf32> to vector<8x256xf32>
    %5 = arith.addf %2, %4 : vector<8x256xf32>
    %6 = vector.extract_strided_slice %5 {offsets = [0, 0], sizes = [8, 128], strides = [1, 1]} : vector<8x256xf32> to vector<8x128xf32>
    %7 = vector.extract_strided_slice %5 {offsets = [0, 128], sizes = [8, 128], strides = [1, 1]} : vector<8x256xf32> to vector<8x128xf32>
    %8 = arith.negf %7 : vector<8x128xf32>
    %9 = math.exp %8 : vector<8x128xf32>
    %cst_5 = arith.constant 1.000000e+00 : f32
    %10 = vector.broadcast %cst_5 : f32 to vector<8x128xf32>
    %11 = arith.addf %10, %9 : vector<8x128xf32>
    %12 = arith.divf %10, %11 : vector<8x128xf32>
    %13 = arith.mulf %6, %12 : vector<8x128xf32>
    %c0_6 = arith.constant 0 : index
    %c0_7 = arith.constant 0 : index
    %14 = vector.load %arg4[%c0_6, %c0_7] : memref<128x256xf32, #tpu.memory_space<vmem>>, vector<128x256xf32>
    %cst_8 = arith.constant dense<0.000000e+00> : vector<8x256xf32>
    %15 = tpu.matmul %13, %14, %cst_8 {dimension_numbers = #tpu.dot_dimension_numbers<[1], [0], [0], [1], [0, 0, 1, 1], [], []>} : vector<8x128xf32>, vector<128x256xf32>, vector<8x256xf32> -> vector<8x256xf32>
    %c0_9 = arith.constant 0 : index
    %c0_10 = arith.constant 0 : index
    %16 = vector.load %arg5[%c0_9, %c0_10] : memref<1x256xf32, #tpu.memory_space<vmem>>, vector<1x256xf32>
    %17 = vector.broadcast %16 : vector<1x256xf32> to vector<8x256xf32>
    %18 = arith.addf %15, %17 : vector<8x256xf32>
    %19 = vector.extract_strided_slice %18 {offsets = [0, 0], sizes = [8, 128], strides = [1, 1]} : vector<8x256xf32> to vector<8x128xf32>
    %20 = vector.extract_strided_slice %18 {offsets = [0, 128], sizes = [8, 128], strides = [1, 1]} : vector<8x256xf32> to vector<8x128xf32>
    %21 = arith.negf %20 : vector<8x128xf32>
    %22 = math.exp %21 : vector<8x128xf32>
    %cst_11 = arith.constant 1.000000e+00 : f32
    %23 = vector.broadcast %cst_11 : f32 to vector<8x128xf32>
    %24 = arith.addf %23, %22 : vector<8x128xf32>
    %25 = arith.divf %23, %24 : vector<8x128xf32>
    %26 = arith.mulf %19, %25 : vector<8x128xf32>
    %c0_12 = arith.constant 0 : index
    %c0_13 = arith.constant 0 : index
    %c0_14 = arith.constant 0 : index
    %27 = vector.load %arg6[%c0_12, %c0_13, %c0_14] : memref<2x1x128xf32, #tpu.memory_space<vmem>>, vector<1x1x128xf32>
    %28 = vector.shape_cast %27 : vector<1x1x128xf32> to vector<1x128xf32>
    %c0_15 = arith.constant 0 : index
    %c0_16 = arith.constant 0 : index
    %c0_17 = arith.constant 0 : index
    %29 = vector.load %arg7[%c0_15, %c0_16, %c0_17] : memref<2x1x128xf32, #tpu.memory_space<vmem>>, vector<1x1x128xf32>
    %30 = vector.shape_cast %29 : vector<1x1x128xf32> to vector<1x128xf32>
    %cst_18 = arith.constant dense<0.000000e+00> : vector<8xf32>
    %31 = vector.multi_reduction <add>, %26, %cst_18 [1] : vector<8x128xf32> to vector<8xf32>
    %32 = vector.shape_cast %31 : vector<8xf32> to vector<8x1xf32>
    %33 = arith.mulf %26, %26 : vector<8x128xf32>
    %cst_19 = arith.constant dense<0.000000e+00> : vector<8xf32>
    %34 = vector.multi_reduction <add>, %33, %cst_19 [1] : vector<8x128xf32> to vector<8xf32>
    %35 = vector.shape_cast %34 : vector<8xf32> to vector<8x1xf32>
    %cst_20 = arith.constant 3.125000e-02 : f32
    %36 = vector.broadcast %cst_20 : f32 to vector<8x1xf32>
    %37 = arith.mulf %32, %36 : vector<8x1xf32>
    %cst_21 = arith.constant 3.125000e-02 : f32
    %38 = vector.broadcast %cst_21 : f32 to vector<8x1xf32>
    %39 = arith.mulf %35, %38 : vector<8x1xf32>
    %40 = arith.mulf %37, %37 : vector<8x1xf32>
    %41 = arith.subf %39, %40 : vector<8x1xf32>
    %cst_22 = arith.constant 0.000000e+00 : f32
    %42 = vector.broadcast %cst_22 : f32 to vector<8x1xf32>
    %43 = arith.maximumf %41, %42 : vector<8x1xf32>
    %44 = vector.broadcast %37 : vector<8x1xf32> to vector<8x128xf32>
    %45 = arith.subf %26, %44 : vector<8x128xf32>
    %cst_23 = arith.constant 9.99999974E-6 : f32
    %46 = vector.broadcast %cst_23 : f32 to vector<8x1xf32>
    %47 = arith.addf %43, %46 : vector<8x1xf32>
    %48 = math.rsqrt %47 : vector<8x1xf32>
    %49 = vector.broadcast %48 : vector<8x1xf32> to vector<8x128xf32>
    %50 = arith.mulf %45, %49 : vector<8x128xf32>
    %51 = vector.broadcast %28 : vector<1x128xf32> to vector<8x128xf32>
    %52 = arith.mulf %50, %51 : vector<8x128xf32>
    %53 = vector.broadcast %30 : vector<1x128xf32> to vector<8x128xf32>
    %54 = arith.addf %52, %53 : vector<8x128xf32>
    %c0_24 = arith.constant 0 : index
    %c0_25 = arith.constant 0 : index
    %c0_26 = arith.constant 0 : index
    %55 = vector.load %arg8[%c0_24, %c0_25, %c0_26] : memref<2x128x256xf32, #tpu.memory_space<vmem>>, vector<1x128x256xf32>
    %56 = vector.shape_cast %55 : vector<1x128x256xf32> to vector<128x256xf32>
    %cst_27 = arith.constant dense<0.000000e+00> : vector<8x256xf32>
    %57 = tpu.matmul %54, %56, %cst_27 {dimension_numbers = #tpu.dot_dimension_numbers<[1], [0], [0], [1], [0, 0, 1, 1], [], []>} : vector<8x128xf32>, vector<128x256xf32>, vector<8x256xf32> -> vector<8x256xf32>
    %c0_28 = arith.constant 0 : index
    %c0_29 = arith.constant 0 : index
    %c0_30 = arith.constant 0 : index
    %58 = vector.load %arg9[%c0_28, %c0_29, %c0_30] : memref<2x1x256xf32, #tpu.memory_space<vmem>>, vector<1x1x256xf32>
    %59 = vector.shape_cast %58 : vector<1x1x256xf32> to vector<1x256xf32>
    %60 = vector.broadcast %59 : vector<1x256xf32> to vector<8x256xf32>
    %61 = arith.addf %57, %60 : vector<8x256xf32>
    %62 = vector.extract_strided_slice %61 {offsets = [0, 0], sizes = [8, 128], strides = [1, 1]} : vector<8x256xf32> to vector<8x128xf32>
    %63 = vector.extract_strided_slice %61 {offsets = [0, 128], sizes = [8, 128], strides = [1, 1]} : vector<8x256xf32> to vector<8x128xf32>
    %64 = arith.negf %63 : vector<8x128xf32>
    %65 = math.exp %64 : vector<8x128xf32>
    %cst_31 = arith.constant 1.000000e+00 : f32
    %66 = vector.broadcast %cst_31 : f32 to vector<8x128xf32>
    %67 = arith.addf %66, %65 : vector<8x128xf32>
    %68 = arith.divf %66, %67 : vector<8x128xf32>
    %69 = arith.mulf %62, %68 : vector<8x128xf32>
    %c0_32 = arith.constant 0 : index
    %c0_33 = arith.constant 0 : index
    %c0_34 = arith.constant 0 : index
    %70 = vector.load %arg10[%c0_32, %c0_33, %c0_34] : memref<2x128x128xf32, #tpu.memory_space<vmem>>, vector<1x128x128xf32>
    %71 = vector.shape_cast %70 : vector<1x128x128xf32> to vector<128x128xf32>
    %cst_35 = arith.constant dense<0.000000e+00> : vector<8x128xf32>
    %72 = tpu.matmul %69, %71, %cst_35 {dimension_numbers = #tpu.dot_dimension_numbers<[1], [0], [0], [1], [0, 0, 1, 1], [], []>} : vector<8x128xf32>, vector<128x128xf32>, vector<8x128xf32> -> vector<8x128xf32>
    %c0_36 = arith.constant 0 : index
    %c0_37 = arith.constant 0 : index
    %c0_38 = arith.constant 0 : index
    %73 = vector.load %arg11[%c0_36, %c0_37, %c0_38] : memref<2x1x128xf32, #tpu.memory_space<vmem>>, vector<1x1x128xf32>
    %74 = vector.shape_cast %73 : vector<1x1x128xf32> to vector<1x128xf32>
    %75 = vector.broadcast %74 : vector<1x128xf32> to vector<8x128xf32>
    %76 = arith.addf %72, %75 : vector<8x128xf32>
    %77 = arith.addf %76, %26 : vector<8x128xf32>
    %c1 = arith.constant 1 : index
    %c0_39 = arith.constant 0 : index
    %c0_40 = arith.constant 0 : index
    %78 = vector.load %arg6[%c1, %c0_39, %c0_40] : memref<2x1x128xf32, #tpu.memory_space<vmem>>, vector<1x1x128xf32>
    %79 = vector.shape_cast %78 : vector<1x1x128xf32> to vector<1x128xf32>
    %c1_41 = arith.constant 1 : index
    %c0_42 = arith.constant 0 : index
    %c0_43 = arith.constant 0 : index
    %80 = vector.load %arg7[%c1_41, %c0_42, %c0_43] : memref<2x1x128xf32, #tpu.memory_space<vmem>>, vector<1x1x128xf32>
    %81 = vector.shape_cast %80 : vector<1x1x128xf32> to vector<1x128xf32>
    %cst_44 = arith.constant dense<0.000000e+00> : vector<8xf32>
    %82 = vector.multi_reduction <add>, %77, %cst_44 [1] : vector<8x128xf32> to vector<8xf32>
    %83 = vector.shape_cast %82 : vector<8xf32> to vector<8x1xf32>
    %84 = arith.mulf %77, %77 : vector<8x128xf32>
    %cst_45 = arith.constant dense<0.000000e+00> : vector<8xf32>
    %85 = vector.multi_reduction <add>, %84, %cst_45 [1] : vector<8x128xf32> to vector<8xf32>
    %86 = vector.shape_cast %85 : vector<8xf32> to vector<8x1xf32>
    %cst_46 = arith.constant 3.125000e-02 : f32
    %87 = vector.broadcast %cst_46 : f32 to vector<8x1xf32>
    %88 = arith.mulf %83, %87 : vector<8x1xf32>
    %cst_47 = arith.constant 3.125000e-02 : f32
    %89 = vector.broadcast %cst_47 : f32 to vector<8x1xf32>
    %90 = arith.mulf %86, %89 : vector<8x1xf32>
    %91 = arith.mulf %88, %88 : vector<8x1xf32>
    %92 = arith.subf %90, %91 : vector<8x1xf32>
    %cst_48 = arith.constant 0.000000e+00 : f32
    %93 = vector.broadcast %cst_48 : f32 to vector<8x1xf32>
    %94 = arith.maximumf %92, %93 : vector<8x1xf32>
    %95 = vector.broadcast %88 : vector<8x1xf32> to vector<8x128xf32>
    %96 = arith.subf %77, %95 : vector<8x128xf32>
    %cst_49 = arith.constant 9.99999974E-6 : f32
    %97 = vector.broadcast %cst_49 : f32 to vector<8x1xf32>
    %98 = arith.addf %94, %97 : vector<8x1xf32>
    %99 = math.rsqrt %98 : vector<8x1xf32>
    %100 = vector.broadcast %99 : vector<8x1xf32> to vector<8x128xf32>
    %101 = arith.mulf %96, %100 : vector<8x128xf32>
    %102 = vector.broadcast %79 : vector<1x128xf32> to vector<8x128xf32>
    %103 = arith.mulf %101, %102 : vector<8x128xf32>
    %104 = vector.broadcast %81 : vector<1x128xf32> to vector<8x128xf32>
    %105 = arith.addf %103, %104 : vector<8x128xf32>
    %c1_50 = arith.constant 1 : index
    %c0_51 = arith.constant 0 : index
    %c0_52 = arith.constant 0 : index
    %106 = vector.load %arg8[%c1_50, %c0_51, %c0_52] : memref<2x128x256xf32, #tpu.memory_space<vmem>>, vector<1x128x256xf32>
    %107 = vector.shape_cast %106 : vector<1x128x256xf32> to vector<128x256xf32>
    %cst_53 = arith.constant dense<0.000000e+00> : vector<8x256xf32>
    %108 = tpu.matmul %105, %107, %cst_53 {dimension_numbers = #tpu.dot_dimension_numbers<[1], [0], [0], [1], [0, 0, 1, 1], [], []>} : vector<8x128xf32>, vector<128x256xf32>, vector<8x256xf32> -> vector<8x256xf32>
    %c1_54 = arith.constant 1 : index
    %c0_55 = arith.constant 0 : index
    %c0_56 = arith.constant 0 : index
    %109 = vector.load %arg9[%c1_54, %c0_55, %c0_56] : memref<2x1x256xf32, #tpu.memory_space<vmem>>, vector<1x1x256xf32>
    %110 = vector.shape_cast %109 : vector<1x1x256xf32> to vector<1x256xf32>
    %111 = vector.broadcast %110 : vector<1x256xf32> to vector<8x256xf32>
    %112 = arith.addf %108, %111 : vector<8x256xf32>
    %113 = vector.extract_strided_slice %112 {offsets = [0, 0], sizes = [8, 128], strides = [1, 1]} : vector<8x256xf32> to vector<8x128xf32>
    %114 = vector.extract_strided_slice %112 {offsets = [0, 128], sizes = [8, 128], strides = [1, 1]} : vector<8x256xf32> to vector<8x128xf32>
    %115 = arith.negf %114 : vector<8x128xf32>
    %116 = math.exp %115 : vector<8x128xf32>
    %cst_57 = arith.constant 1.000000e+00 : f32
    %117 = vector.broadcast %cst_57 : f32 to vector<8x128xf32>
    %118 = arith.addf %117, %116 : vector<8x128xf32>
    %119 = arith.divf %117, %118 : vector<8x128xf32>
    %120 = arith.mulf %113, %119 : vector<8x128xf32>
    %c1_58 = arith.constant 1 : index
    %c0_59 = arith.constant 0 : index
    %c0_60 = arith.constant 0 : index
    %121 = vector.load %arg10[%c1_58, %c0_59, %c0_60] : memref<2x128x128xf32, #tpu.memory_space<vmem>>, vector<1x128x128xf32>
    %122 = vector.shape_cast %121 : vector<1x128x128xf32> to vector<128x128xf32>
    %cst_61 = arith.constant dense<0.000000e+00> : vector<8x128xf32>
    %123 = tpu.matmul %120, %122, %cst_61 {dimension_numbers = #tpu.dot_dimension_numbers<[1], [0], [0], [1], [0, 0, 1, 1], [], []>} : vector<8x128xf32>, vector<128x128xf32>, vector<8x128xf32> -> vector<8x128xf32>
    %c1_62 = arith.constant 1 : index
    %c0_63 = arith.constant 0 : index
    %c0_64 = arith.constant 0 : index
    %124 = vector.load %arg11[%c1_62, %c0_63, %c0_64] : memref<2x1x128xf32, #tpu.memory_space<vmem>>, vector<1x1x128xf32>
    %125 = vector.shape_cast %124 : vector<1x1x128xf32> to vector<1x128xf32>
    %126 = vector.broadcast %125 : vector<1x128xf32> to vector<8x128xf32>
    %127 = arith.addf %123, %126 : vector<8x128xf32>
    %128 = arith.addf %127, %77 : vector<8x128xf32>
    %c0_65 = arith.constant 0 : index
    %c0_66 = arith.constant 0 : index
    %129 = vector.load %arg12[%c0_65, %c0_66] : memref<1x128xf32, #tpu.memory_space<vmem>>, vector<1x128xf32>
    %c0_67 = arith.constant 0 : index
    %c0_68 = arith.constant 0 : index
    %130 = vector.load %arg13[%c0_67, %c0_68] : memref<1x128xf32, #tpu.memory_space<vmem>>, vector<1x128xf32>
    %cst_69 = arith.constant dense<0.000000e+00> : vector<8xf32>
    %131 = vector.multi_reduction <add>, %128, %cst_69 [1] : vector<8x128xf32> to vector<8xf32>
    %132 = vector.shape_cast %131 : vector<8xf32> to vector<8x1xf32>
    %133 = arith.mulf %128, %128 : vector<8x128xf32>
    %cst_70 = arith.constant dense<0.000000e+00> : vector<8xf32>
    %134 = vector.multi_reduction <add>, %133, %cst_70 [1] : vector<8x128xf32> to vector<8xf32>
    %135 = vector.shape_cast %134 : vector<8xf32> to vector<8x1xf32>
    %cst_71 = arith.constant 3.125000e-02 : f32
    %136 = vector.broadcast %cst_71 : f32 to vector<8x1xf32>
    %137 = arith.mulf %132, %136 : vector<8x1xf32>
    %cst_72 = arith.constant 3.125000e-02 : f32
    %138 = vector.broadcast %cst_72 : f32 to vector<8x1xf32>
    %139 = arith.mulf %135, %138 : vector<8x1xf32>
    %140 = arith.mulf %137, %137 : vector<8x1xf32>
    %141 = arith.subf %139, %140 : vector<8x1xf32>
    %cst_73 = arith.constant 0.000000e+00 : f32
    %142 = vector.broadcast %cst_73 : f32 to vector<8x1xf32>
    %143 = arith.maximumf %141, %142 : vector<8x1xf32>
    %144 = vector.broadcast %137 : vector<8x1xf32> to vector<8x128xf32>
    %145 = arith.subf %128, %144 : vector<8x128xf32>
    %cst_74 = arith.constant 9.99999974E-6 : f32
    %146 = vector.broadcast %cst_74 : f32 to vector<8x1xf32>
    %147 = arith.addf %143, %146 : vector<8x1xf32>
    %148 = math.rsqrt %147 : vector<8x1xf32>
    %149 = vector.broadcast %148 : vector<8x1xf32> to vector<8x128xf32>
    %150 = arith.mulf %145, %149 : vector<8x128xf32>
    %151 = vector.broadcast %129 : vector<1x128xf32> to vector<8x128xf32>
    %152 = arith.mulf %150, %151 : vector<8x128xf32>
    %153 = vector.broadcast %130 : vector<1x128xf32> to vector<8x128xf32>
    %154 = arith.addf %152, %153 : vector<8x128xf32>
    %c0_75 = arith.constant 0 : index
    %c0_76 = arith.constant 0 : index
    %155 = vector.load %arg14[%c0_75, %c0_76] : memref<128x256xf32, #tpu.memory_space<vmem>>, vector<128x256xf32>
    %cst_77 = arith.constant dense<0.000000e+00> : vector<8x256xf32>
    %156 = tpu.matmul %154, %155, %cst_77 {dimension_numbers = #tpu.dot_dimension_numbers<[1], [0], [0], [1], [0, 0, 1, 1], [], []>} : vector<8x128xf32>, vector<128x256xf32>, vector<8x256xf32> -> vector<8x256xf32>
    %c0_78 = arith.constant 0 : index
    %c0_79 = arith.constant 0 : index
    %157 = vector.load %arg15[%c0_78, %c0_79] : memref<1x256xf32, #tpu.memory_space<vmem>>, vector<1x256xf32>
    %158 = vector.broadcast %157 : vector<1x256xf32> to vector<8x256xf32>
    %159 = arith.addf %156, %158 : vector<8x256xf32>
    %160 = vector.extract_strided_slice %159 {offsets = [0, 0], sizes = [8, 128], strides = [1, 1]} : vector<8x256xf32> to vector<8x128xf32>
    %161 = vector.extract_strided_slice %159 {offsets = [0, 128], sizes = [8, 128], strides = [1, 1]} : vector<8x256xf32> to vector<8x128xf32>
    %162 = arith.negf %161 : vector<8x128xf32>
    %163 = math.exp %162 : vector<8x128xf32>
    %cst_80 = arith.constant 1.000000e+00 : f32
    %164 = vector.broadcast %cst_80 : f32 to vector<8x128xf32>
    %165 = arith.addf %164, %163 : vector<8x128xf32>
    %166 = arith.divf %164, %165 : vector<8x128xf32>
    %167 = arith.mulf %160, %166 : vector<8x128xf32>
    %c0_81 = arith.constant 0 : index
    %c0_82 = arith.constant 0 : index
    %168 = vector.load %arg16[%c0_81, %c0_82] : memref<128x128xf32, #tpu.memory_space<vmem>>, vector<128x128xf32>
    %cst_83 = arith.constant dense<0.000000e+00> : vector<8x128xf32>
    %169 = tpu.matmul %167, %168, %cst_83 {dimension_numbers = #tpu.dot_dimension_numbers<[1], [0], [0], [1], [0, 0, 1, 1], [], []>} : vector<8x128xf32>, vector<128x128xf32>, vector<8x128xf32> -> vector<8x128xf32>
    %c0_84 = arith.constant 0 : index
    %c0_85 = arith.constant 0 : index
    %170 = vector.load %arg17[%c0_84, %c0_85] : memref<1x128xf32, #tpu.memory_space<vmem>>, vector<1x128xf32>
    %171 = vector.broadcast %170 : vector<1x128xf32> to vector<8x128xf32>
    %172 = arith.addf %169, %171 : vector<8x128xf32>
    %173 = tpu.iota {dimensions = array<i32: 1>} : vector<8x128xi32>
    %c10_i32 = arith.constant 10 : i32
    %174 = vector.broadcast %c10_i32 : i32 to vector<8x128xi32>
    %175 = arith.cmpi sge, %173, %174 : vector<8x128xi32>
    %c12_i32 = arith.constant 12 : i32
    %176 = vector.broadcast %c12_i32 : i32 to vector<8x128xi32>
    %177 = arith.cmpi slt, %173, %176 : vector<8x128xi32>
    %178 = arith.andi %175, %177 : vector<8x128xi1>
    %179 = math.absf %172 : vector<8x128xf32>
    %cst_86 = arith.constant 0.000000e+00 : f32
    %180 = vector.broadcast %cst_86 : f32 to vector<8x128xf32>
    %181 = arith.subf %180, %179 : vector<8x128xf32>
    %182 = math.exp %181 : vector<8x128xf32>
    %183 = math.log1p %182 : vector<8x128xf32>
    %cst_87 = arith.constant 0.000000e+00 : f32
    %184 = vector.broadcast %cst_87 : f32 to vector<8x128xf32>
    %185 = arith.maximumf %172, %184 : vector<8x128xf32>
    %186 = arith.addf %183, %185 : vector<8x128xf32>
    %cst_88 = arith.constant 9.99999997E-7 : f32
    %187 = vector.broadcast %cst_88 : f32 to vector<8x128xf32>
    %188 = arith.addf %186, %187 : vector<8x128xf32>
    %189 = arith.select %178, %188, %172 : vector<8x128xi1>, vector<8x128xf32>
    %c0_89 = arith.constant 0 : index
    %c0_90 = arith.constant 0 : index
    %190 = vector.load %arg18[%c0_89, %c0_90] : memref<8x128xf32, #tpu.memory_space<vmem>>, vector<8x128xf32>
    tpu.vector_store %arg18[%c0_89, %c0_90], %189 {strides = array<i32>} : memref<8x128xf32, #tpu.memory_space<vmem>>, vector<8x128xf32>,
    return
  }
  func.func @transform_0(%arg0: i32) -> (i32, i32) {
    %c0_i32 = arith.constant 0 : i32
    %c0_i32_0 = arith.constant 0 : i32
    return %arg0, %c0_i32 : i32, i32
  }
  func.func @transform_1(%arg0: i32) -> (i32, i32) {
    %c0_i32 = arith.constant 0 : i32
    %c0_i32_0 = arith.constant 0 : i32
    %c0_i32_1 = arith.constant 0 : i32
    return %c0_i32, %c0_i32_0 : i32, i32
  }
  func.func @transform_2(%arg0: i32) -> (i32, i32) {
    %c0_i32 = arith.constant 0 : i32
    %c0_i32_0 = arith.constant 0 : i32
    %c0_i32_1 = arith.constant 0 : i32
    return %c0_i32, %c0_i32_0 : i32, i32
  }
  func.func @transform_3(%arg0: i32) -> (i32, i32) {
    %c0_i32 = arith.constant 0 : i32
    %c0_i32_0 = arith.constant 0 : i32
    %c0_i32_1 = arith.constant 0 : i32
    return %c0_i32, %c0_i32_0 : i32, i32
  }
  func.func @transform_4(%arg0: i32) -> (i32, i32) {
    %c0_i32 = arith.constant 0 : i32
    %c0_i32_0 = arith.constant 0 : i32
    %c0_i32_1 = arith.constant 0 : i32
    return %c0_i32, %c0_i32_0 : i32, i32
  }
  func.func @transform_5(%arg0: i32) -> (i32, i32, i32) {
    %c0_i32 = arith.constant 0 : i32
    %c0_i32_0 = arith.constant 0 : i32
    %c0_i32_1 = arith.constant 0 : i32
    %c0_i32_2 = arith.constant 0 : i32
    return %c0_i32, %c0_i32_0, %c0_i32_1 : i32, i32, i32
  }
  func.func @transform_6(%arg0: i32) -> (i32, i32, i32) {
    %c0_i32 = arith.constant 0 : i32
    %c0_i32_0 = arith.constant 0 : i32
    %c0_i32_1 = arith.constant 0 : i32
    %c0_i32_2 = arith.constant 0 : i32
    return %c0_i32, %c0_i32_0, %c0_i32_1 : i32, i32, i32
  }
  func.func @transform_7(%arg0: i32) -> (i32, i32, i32) {
    %c0_i32 = arith.constant 0 : i32
    %c0_i32_0 = arith.constant 0 : i32
    %c0_i32_1 = arith.constant 0 : i32
    %c0_i32_2 = arith.constant 0 : i32
    return %c0_i32, %c0_i32_0, %c0_i32_1 : i32, i32, i32
  }
  func.func @transform_8(%arg0: i32) -> (i32, i32, i32) {
    %c0_i32 = arith.constant 0 : i32
    %c0_i32_0 = arith.constant 0 : i32
    %c0_i32_1 = arith.constant 0 : i32
    %c0_i32_2 = arith.constant 0 : i32
    return %c0_i32, %c0_i32_0, %c0_i32_1 : i32, i32, i32
  }
  func.func @transform_9(%arg0: i32) -> (i32, i32, i32) {
    %c0_i32 = arith.constant 0 : i32
    %c0_i32_0 = arith.constant 0 : i32
    %c0_i32_1 = arith.constant 0 : i32
    %c0_i32_2 = arith.constant 0 : i32
    return %c0_i32, %c0_i32_0, %c0_i32_1 : i32, i32, i32
  }
  func.func @transform_10(%arg0: i32) -> (i32, i32, i32) {
    %c0_i32 = arith.constant 0 : i32
    %c0_i32_0 = arith.constant 0 : i32
    %c0_i32_1 = arith.constant 0 : i32
    %c0_i32_2 = arith.constant 0 : i32
    return %c0_i32, %c0_i32_0, %c0_i32_1 : i32, i32, i32
  }
  func.func @transform_11(%arg0: i32) -> (i32, i32) {
    %c0_i32 = arith.constant 0 : i32
    %c0_i32_0 = arith.constant 0 : i32
    %c0_i32_1 = arith.constant 0 : i32
    return %c0_i32, %c0_i32_0 : i32, i32
  }
  func.func @transform_12(%arg0: i32) -> (i32, i32) {
    %c0_i32 = arith.constant 0 : i32
    %c0_i32_0 = arith.constant 0 : i32
    %c0_i32_1 = arith.constant 0 : i32
    return %c0_i32, %c0_i32_0 : i32, i32
  }
  func.func @transform_13(%arg0: i32) -> (i32, i32) {
    %c0_i32 = arith.constant 0 : i32
    %c0_i32_0 = arith.constant 0 : i32
    %c0_i32_1 = arith.constant 0 : i32
    return %c0_i32, %c0_i32_0 : i32, i32
  }
  func.func @transform_14(%arg0: i32) -> (i32, i32) {
    %c0_i32 = arith.constant 0 : i32
    %c0_i32_0 = arith.constant 0 : i32
    %c0_i32_1 = arith.constant 0 : i32
    return %c0_i32, %c0_i32_0 : i32, i32
  }
  func.func @transform_15(%arg0: i32) -> (i32, i32) {
    %c0_i32 = arith.constant 0 : i32
    %c0_i32_0 = arith.constant 0 : i32
    %c0_i32_1 = arith.constant 0 : i32
    return %c0_i32, %c0_i32_0 : i32, i32
  }
  func.func @transform_16(%arg0: i32) -> (i32, i32) {
    %c0_i32 = arith.constant 0 : i32
    %c0_i32_0 = arith.constant 0 : i32
    %c0_i32_1 = arith.constant 0 : i32
    return %c0_i32, %c0_i32_0 : i32, i32
  }
  func.func @transform_17(%arg0: i32) -> (i32, i32) {
    %c0_i32 = arith.constant 0 : i32
    %c0_i32_0 = arith.constant 0 : i32
    return %arg0, %c0_i32 : i32, i32
  }
}

</mosaic_0001>

<llo_original>
// kernel: tpu_custom_call.1
$region0: #{tpu_custom_call.1}
  #allocation0 [shape = 'u32[]', space=smem, size = 0x4, offset = 0x4, fixed_abs, tag = 'smem constant byte address 0x4 - core index']
  #allocation1 [shape = 'u32[144,128]{1,0:T(1,128)}', space=vmem, size = 0x12000, scoped, tag = 'internal scratch']
  %s0 = inlined_call_operand.hbm [shape: f32[8,8], index: 0, kind: input, shape index: {}]
  %s1 = inlined_call_operand.hbm [shape: f32[8,256], index: 1, kind: input, shape index: {}]
  %s2 = inlined_call_operand.vmem [shape: f32[1,256], index: 2, kind: input, shape index: {}]
  %s3 = inlined_call_operand.hbm [shape: f32[128,256], index: 3, kind: input, shape index: {}]
  %s4 = inlined_call_operand.vmem [shape: f32[1,256], index: 4, kind: input, shape index: {}]
  %s5 = inlined_call_operand.vmem [shape: f32[2,1,128], index: 5, kind: input, shape index: {}]
  %s6 = inlined_call_operand.vmem [shape: f32[2,1,128], index: 6, kind: input, shape index: {}]
  %s7 = inlined_call_operand.hbm [shape: f32[2,128,256], index: 7, kind: input, shape index: {}]
  %s8 = inlined_call_operand.vmem [shape: f32[2,1,256], index: 8, kind: input, shape index: {}]
  %s9 = inlined_call_operand.hbm [shape: f32[2,128,128], index: 9, kind: input, shape index: {}]
  %s10 = inlined_call_operand.vmem [shape: f32[2,1,128], index: 10, kind: input, shape index: {}]
  %s11 = inlined_call_operand.vmem [shape: f32[1,128], index: 11, kind: input, shape index: {}]
  %s12 = inlined_call_operand.vmem [shape: f32[1,128], index: 12, kind: input, shape index: {}]
  %s13 = inlined_call_operand.hbm [shape: f32[128,256], index: 13, kind: input, shape index: {}]
  %s14 = inlined_call_operand.vmem [shape: f32[1,256], index: 14, kind: input, shape index: {}]
  %s15 = inlined_call_operand.hbm [shape: f32[128,128], index: 15, kind: input, shape index: {}]
  %s16 = inlined_call_operand.vmem [shape: f32[1,128], index: 16, kind: input, shape index: {}]
  %s17 = inlined_call_operand.hbm [shape: f32[8,128], index: 17, kind: output, shape index: {}]
  %s18 = sld [smem:[#allocation0]]
  $region106: #{tpu_custom_call.1} parent=0
    _
  %s20 = ssub.s32 1, %s18
  %s21 = scalar_select 0, %s20, %s18
  $region1: #{tpu_custom_call.1} parent=0
    #allocation2 [shape = 'u8[4096]{0}', space=vmem, size = 0x1000, scoped, tag = 'input window, operand 0, single buffered']
    #allocation3 [shape = 's32[1]{0}', space=sflag, size = 0x4, scoped, tag = 'scoped memory for tpu_custom_call.1']
    #allocation4 [shape = 's32[1]{0}', space=sflag, size = 0x4, scoped, tag = 'scoped memory for tpu_custom_call.1']
    #allocation5 [shape = 'u8[8192]{0}', space=vmem, size = 0x2000, scoped, tag = 'input window, operand 1, single buffered']
    #allocation6 [shape = 's32[1]{0}', space=sflag, size = 0x4, scoped, tag = 'scoped memory for tpu_custom_call.1']
    #allocation7 [shape = 'u8[131072]{0}', space=vmem, size = 0x20000, scoped, tag = 'input window, operand 3, single buffered']
    #allocation8 [shape = 'u8[262144]{0}', space=vmem, size = 0x40000, scoped, tag = 'input window, operand 7, single buffered']
    #allocation9 [shape = 's32[1]{0}', space=sflag, size = 0x4, scoped, tag = 'scoped memory for tpu_custom_call.1']
    #allocation10 [shape = 'u8[131072]{0}', space=vmem, size = 0x20000, scoped, tag = 'input window, operand 9, single buffered']
    #allocation11 [shape = 'u8[131072]{0}', space=vmem, size = 0x20000, scoped, tag = 'input window, operand 13, single buffered']
    #allocation12 [shape = 's32[1]{0}', space=sflag, size = 0x4, scoped, tag = 'scoped memory for tpu_custom_call.1']
    #allocation13 [shape = 'u8[65536]{0}', space=vmem, size = 0x10000, scoped, tag = 'input window, operand 15, single buffered']
    #allocation14 [shape = 'u8[4096]{0}', space=vmem, size = 0x1000, scoped, tag = 'output window, operand 0, single buffered']
    %22 = vsyncpa [#allocation3], 0
    %23 = vsyncpa [#allocation6], 0
    %24 = vsyncpa [#allocation9], 0
    %25 = vsyncpa [#allocation12], 0
    %26 = vsyncpa [#allocation4], 0
    // Predicated region
    $region2: #{tpu_custom_call.1} parent=1 // pred_check
      _
    $region3: #{tpu_custom_call.1} parent=1 // pred_check_branch
      %28 = sbr.rel (0) target = $region5
    $region4: #{tpu_custom_call.1} parent=1 // pred_region
      %s30 = ssub.s32 128, 128
      %31 = vsyncadd [#allocation3], %s30
      %s33 = sshll.u32 [#allocation2], 4
      %s34 = int_to_ptr.vmem [resolvable:$true] %s33
      %36 = dma.hbm_to_vmem [thread:$0]  %s0, 128, %s34, [#allocation3]
    $region5: #{tpu_custom_call.1} parent=1 // pred_fallthru
      _
    // Predicated region
    $region6: #{tpu_custom_call.1} parent=1 // pred_check
      _
    $region7: #{tpu_custom_call.1} parent=1 // pred_check_branch
      %38 = sbr.rel (0) target = $region9
    $region8: #{tpu_custom_call.1} parent=1 // pred_region
      %s40 = ssub.s32 256, 256
      %41 = vsyncadd [#allocation6], %s40
      %s43 = sshll.u32 [#allocation5], 4
      %s44 = int_to_ptr.vmem [resolvable:$true] %s43
      %46 = dma.hbm_to_vmem [thread:$0]  %s1, 256, %s44, [#allocation6]
    $region9: #{tpu_custom_call.1} parent=1 // pred_fallthru
      _
    // Predicated region
    $region10: #{tpu_custom_call.1} parent=1 // pred_check
      _
    $region11: #{tpu_custom_call.1} parent=1 // pred_check_branch
      %48 = sbr.rel (0) target = $region13
    $region12: #{tpu_custom_call.1} parent=1 // pred_region
      _
    $region13: #{tpu_custom_call.1} parent=1 // pred_fallthru
      _
    // Predicated region
    $region14: #{tpu_custom_call.1} parent=1 // pred_check
      _
    $region15: #{tpu_custom_call.1} parent=1 // pred_check_branch
      %50 = sbr.rel (0) target = $region17
    $region16: #{tpu_custom_call.1} parent=1 // pred_region
      %s52 = ssub.s32 4096, 4096
      %53 = vsyncadd [#allocation6], %s52
      %s54 = sshll.u32 [#allocation7], 4
      %s55 = int_to_ptr.vmem [resolvable:$true] %s54
      %60 = dma.hbm_to_vmem [thread:$0]  %s3, 4096, %s55, [#allocation6], 256, 256, 16
    $region17: #{tpu_custom_call.1} parent=1 // pred_fallthru
      _
    // Predicated region
    $region18: #{tpu_custom_call.1} parent=1 // pred_check
      _
    $region19: #{tpu_custom_call.1} parent=1 // pred_check_branch
      %62 = sbr.rel (0) target = $region21
    $region20: #{tpu_custom_call.1} parent=1 // pred_region
      _
    $region21: #{tpu_custom_call.1} parent=1 // pred_fallthru
      _
    // Predicated region
    $region22: #{tpu_custom_call.1} parent=1 // pred_check
      _
    $region23: #{tpu_custom_call.1} parent=1 // pred_check_branch
      %64 = sbr.rel (0) target = $region25
    $region24: #{tpu_custom_call.1} parent=1 // pred_region
      _
    $region25: #{tpu_custom_call.1} parent=1 // pred_fallthru
      _
    // Predicated region
    $region26: #{tpu_custom_call.1} parent=1 // pred_check
      _
    $region27: #{tpu_custom_call.1} parent=1 // pred_check_branch
      %66 = sbr.rel (0) target = $region29
    $region28: #{tpu_custom_call.1} parent=1 // pred_region
      _
    $region29: #{tpu_custom_call.1} parent=1 // pred_fallthru
      _
    // Predicated region
    $region30: #{tpu_custom_call.1} parent=1 // pred_check
      _
    $region31: #{tpu_custom_call.1} parent=1 // pred_check_branch
      %68 = sbr.rel (0) target = $region33
    $region32: #{tpu_custom_call.1} parent=1 // pred_region
      %s70 = ssub.s32 8192, 8192
      %71 = vsyncadd [#allocation9], %s70
      %s72 = sshll.u32 [#allocation8], 4
      %s73 = int_to_ptr.vmem [resolvable:$true] %s72
      %78 = dma.hbm_to_vmem [thread:$0]  %s7, 8192, %s73, [#allocation9], 256, 256, 16
    $region33: #{tpu_custom_call.1} parent=1 // pred_fallthru
      _
    // Predicated region
    $region34: #{tpu_custom_call.1} parent=1 // pred_check
      _
    $region35: #{tpu_custom_call.1} parent=1 // pred_check_branch
      %80 = sbr.rel (0) target = $region37
    $region36: #{tpu_custom_call.1} parent=1 // pred_region
      _
    $region37: #{tpu_custom_call.1} parent=1 // pred_fallthru
      _
    // Predicated region
    $region38: #{tpu_custom_call.1} parent=1 // pred_check
      _
    $region39: #{tpu_custom_call.1} parent=1 // pred_check_branch
      %82 = sbr.rel (0) target = $region41
    $region40: #{tpu_custom_call.1} parent=1 // pred_region
      %s84 = ssub.s32 4096, 4096
      %85 = vsyncadd [#allocation9], %s84
      %s86 = sshll.u32 [#allocation10], 4
      %s87 = int_to_ptr.vmem [resolvable:$true] %s86
      %92 = dma.hbm_to_vmem [thread:$0]  %s9, 4096, %s87, [#allocation9], 128, 128, 8
    $region41: #{tpu_custom_call.1} parent=1 // pred_fallthru
      _
    // Predicated region
    $region42: #{tpu_custom_call.1} parent=1 // pred_check
      _
    $region43: #{tpu_custom_call.1} parent=1 // pred_check_branch
      %94 = sbr.rel (0) target = $region45
    $region44: #{tpu_custom_call.1} parent=1 // pred_region
      _
    $region45: #{tpu_custom_call.1} parent=1 // pred_fallthru
      _
    // Predicated region
    $region46: #{tpu_custom_call.1} parent=1 // pred_check
      _
    $region47: #{tpu_custom_call.1} parent=1 // pred_check_branch
      %96 = sbr.rel (0) target = $region49
    $region48: #{tpu_custom_call.1} parent=1 // pred_region
      _
    $region49: #{tpu_custom_call.1} parent=1 // pred_fallthru
      _
    // Predicated region
    $region50: #{tpu_custom_call.1} parent=1 // pred_check
      _
    $region51: #{tpu_custom_call.1} parent=1 // pred_check_branch
      %98 = sbr.rel (0) target = $region53
    $region52: #{tpu_custom_call.1} parent=1 // pred_region
      _
    $region53: #{tpu_custom_call.1} parent=1 // pred_fallthru
      _
    // Predicated region
    $region54: #{tpu_custom_call.1} parent=1 // pred_check
      _
    $region55: #{tpu_custom_call.1} parent=1 // pred_check_branch
      %100 = sbr.rel (0) target = $region57
    $region56: #{tpu_custom_call.1} parent=1 // pred_region
      %s102 = ssub.s32 4096, 4096
      %103 = vsyncadd [#allocation12], %s102
      %s104 = sshll.u32 [#allocation11], 4
      %s105 = int_to_ptr.vmem [resolvable:$true] %s104
      %110 = dma.hbm_to_vmem [thread:$0]  %s13, 4096, %s105, [#allocation12], 256, 256, 16
    $region57: #{tpu_custom_call.1} parent=1 // pred_fallthru
      _
    // Predicated region
    $region58: #{tpu_custom_call.1} parent=1 // pred_check
      _
    $region59: #{tpu_custom_call.1} parent=1 // pred_check_branch
      %112 = sbr.rel (0) target = $region61
    $region60: #{tpu_custom_call.1} parent=1 // pred_region
      _
    $region61: #{tpu_custom_call.1} parent=1 // pred_fallthru
      _
    // Predicated region
    $region62: #{tpu_custom_call.1} parent=1 // pred_check
      _
    $region63: #{tpu_custom_call.1} parent=1 // pred_check_branch
      %114 = sbr.rel (0) target = $region65
    $region64: #{tpu_custom_call.1} parent=1 // pred_region
      %s116 = ssub.s32 2048, 2048
      %117 = vsyncadd [#allocation12], %s116
      %s118 = sshll.u32 [#allocation13], 4
      %s119 = int_to_ptr.vmem [resolvable:$true] %s118
      %124 = dma.hbm_to_vmem [thread:$0]  %s15, 2048, %s119, [#allocation12], 128, 128, 8
    $region65: #{tpu_custom_call.1} parent=1 // pred_fallthru
      _
    // Predicated region
    $region66: #{tpu_custom_call.1} parent=1 // pred_check
      _
    $region67: #{tpu_custom_call.1} parent=1 // pred_check_branch
      %126 = sbr.rel (0) target = $region69
    $region68: #{tpu_custom_call.1} parent=1 // pred_region
      _
    $region69: #{tpu_custom_call.1} parent=1 // pred_fallthru
      _
    // Predicated region
    $region70: #{tpu_custom_call.1} parent=1 // pred_check
      _
    $region71: #{tpu_custom_call.1} parent=1 // pred_check_branch
      %128 = sbr.rel (0) target = $region73
    $region72: #{tpu_custom_call.1} parent=1 // pred_region
      %129 = dma.done [#allocation3], 128
    $region73: #{tpu_custom_call.1} parent=1 // pred_fallthru
      _
    // Predicated region
    $region74: #{tpu_custom_call.1} parent=1 // pred_check
      _
    $region75: #{tpu_custom_call.1} parent=1 // pred_check_branch
      %131 = sbr.rel (0) target = $region77
    $region76: #{tpu_custom_call.1} parent=1 // pred_region
      %132 = dma.done [#allocation6], 256
    $region77: #{tpu_custom_call.1} parent=1 // pred_fallthru
      _
    // Predicated region
    $region78: #{tpu_custom_call.1} parent=1 // pred_check
      _
    $region79: #{tpu_custom_call.1} parent=1 // pred_check_branch
      %134 = sbr.rel (0) target = $region81
    $region80: #{tpu_custom_call.1} parent=1 // pred_region
      %135 = dma.done [#allocation6], 4096
    $region81: #{tpu_custom_call.1} parent=1 // pred_fallthru
      _
    // Predicated region
    $region82: #{tpu_custom_call.1} parent=1 // pred_check
      _
    $region83: #{tpu_custom_call.1} parent=1 // pred_check_branch
      %137 = sbr.rel (0) target = $region85
    $region84: #{tpu_custom_call.1} parent=1 // pred_region
      %138 = dma.done [#allocation9], 8192
    $region85: #{tpu_custom_call.1} parent=1 // pred_fallthru
      _
    // Predicated region
    $region86: #{tpu_custom_call.1} parent=1 // pred_check
      _
    $region87: #{tpu_custom_call.1} parent=1 // pred_check_branch
      %140 = sbr.rel (0) target = $region89
    $region88: #{tpu_custom_call.1} parent=1 // pred_region
      %141 = dma.done [#allocation9], 4096
    $region89: #{tpu_custom_call.1} parent=1 // pred_fallthru
      _
    // Predicated region
    $region90: #{tpu_custom_call.1} parent=1 // pred_check
      _
    $region91: #{tpu_custom_call.1} parent=1 // pred_check_branch
      %143 = sbr.rel (0) target = $region93
    $region92: #{tpu_custom_call.1} parent=1 // pred_region
      %144 = dma.done [#allocation12], 4096
    $region93: #{tpu_custom_call.1} parent=1 // pred_fallthru
      _
    // Predicated region
    $region94: #{tpu_custom_call.1} parent=1 // pred_check
      _
    $region95: #{tpu_custom_call.1} parent=1 // pred_check_branch
      %146 = sbr.rel (0) target = $region97
    $region96: #{tpu_custom_call.1} parent=1 // pred_region
      %147 = dma.done [#allocation12], 2048
    $region97: #{tpu_custom_call.1} parent=1 // pred_fallthru
      _
    %v148 = vld [vmem:[#allocation2] sm:$0xff]
    %v149 = vld [vmem:[#allocation5] sm:$0xff]
    %v150 = vld [vmem:[#allocation5 + $0x8] sm:$0xff]
    %v151 = vld [vmem:[%s2] sm:$0x3]
    %v153 = vlaneseq
    %v154 = vshrl.u32 %v153, 7
    %v155 = vsub.s32 0, %v154
    %v156 = vrot.slane %v151, %v155
    %v157 = vlaneseq
    %v158 = vshrl.u32 %v157, 7
    %v159 = vsub.s32 1, %v158
    %v160 = vrot.slane %v151, %v159
    %vm163 = vcmask 64512
    %v165 = vsel %vm163, %v148, 0
    %167 = vmatprep.subr.mxu0 %v150
    %168 = vmatpush1.msra.mxu0 %v149
    %169 = vmatprep.subr.mxu0 0.0
    %170 = vmatpush1.msra.mxu0 0.0
    %171 = vmatprep.subr.mxu0 0.0
    %172 = vmatpush1.msra.mxu0 0.0
    %173 = vmatprep.subr.mxu0 0.0
    %174 = vmatpush1.msra.mxu0 0.0
    %175 = vmatprep.subr.mxu0 0.0
    %176 = vmatpush1.msra.mxu0 0.0
    %177 = vmatprep.subr.mxu0 0.0
    %178 = vmatpush1.msra.mxu0 0.0
    %179 = vmatprep.subr.mxu0 0.0
    %180 = vmatpush1.msra.mxu0 0.0
    %181 = vmatprep.subr.mxu0 0.0
    %182 = vmatpush1.msra.mxu0 0.0
    %183 = vmatprep.subr.mxu0 0.0
    %184 = vmatpush1.msra.mxu0 0.0
    %185 = vmatprep.subr.mxu0 0.0
    %186 = vmatpush1.msra.mxu0 0.0
    %187 = vmatprep.subr.mxu0 0.0
    %188 = vmatpush1.msra.mxu0 0.0
    %189 = vmatprep.subr.mxu0 0.0
    %190 = vmatpush1.msra.mxu0 0.0
    %191 = vmatprep.subr.mxu0 0.0
    %192 = vmatpush1.msra.mxu0 0.0
    %193 = vmatprep.subr.mxu0 0.0
    %194 = vmatpush1.msra.mxu0 0.0
    %195 = vmatprep.subr.mxu0 0.0
    %196 = vmatpush1.msra.mxu0 0.0
    %197 = vmatprep.subr.mxu0 0.0
    %198 = vmatpush1.msra.mxu0 0.0
    %199 = vmatprep.subr.mxu0 0.0
    %200 = vmatpush1.msra.mxu0 0.0
    %201 = vmatprep.subr.mxu0 0.0
    %202 = vmatpush1.msra.mxu0 0.0
    %203 = vmatprep.subr.mxu0 0.0
    %204 = vmatpush1.msra.mxu0 0.0
    %205 = vmatprep.subr.mxu0 0.0
    %206 = vmatpush1.msra.mxu0 0.0
    %207 = vmatprep.subr.mxu0 0.0
    %208 = vmatpush1.msra.mxu0 0.0
    %209 = vmatprep.subr.mxu0 0.0
    %210 = vmatpush1.msra.mxu0 0.0
    %211 = vmatprep.subr.mxu0 0.0
    %212 = vmatpush1.msra.mxu0 0.0
    %213 = vmatprep.subr.mxu0 0.0
    %214 = vmatpush1.msra.mxu0 0.0
    %215 = vmatprep.subr.mxu0 0.0
    %216 = vmatpush1.msra.mxu0 0.0
    %217 = vmatprep.subr.mxu0 0.0
    %218 = vmatpush1.msra.mxu0 0.0
    %219 = vmatprep.subr.mxu0 0.0
    %220 = vmatpush1.msra.mxu0 0.0
    %221 = vmatprep.subr.mxu0 0.0
    %222 = vmatpush1.msra.mxu0 0.0
    %223 = vmatprep.subr.mxu0 0.0
    %224 = vmatpush1.msra.mxu0 0.0
    %225 = vmatprep.subr.mxu0 0.0
    %226 = vmatpush1.msra.mxu0 0.0
    %227 = vmatprep.subr.mxu0 0.0
    %228 = vmatpush1.msra.mxu0 0.0
    %229 = vmatprep.subr.mxu0 0.0
    %230 = vmatpush1.msra.mxu0 0.0
    %231 = vmatprep.mubr.f32.mxu0 0.0
    %232 = vmatmul.mubr.f32.gmra.mrb[0].mxu0 %v165
    %v233 = vpop.f32.mrb[0].mxu0
    %v234 = vadd.f32 %v156, %v233
    %v235 = vpop.f32.mrb[0].mxu0
    %v236 = vadd.f32 %v160, %v235
    %237 = vdwg.mxu0
    %v238 = vxor.u32 %v236, 2147483648
    %v239 = vmul.f32 %v238, 1.442695
    %v240 = vpow.pop %v239
    %v241 = vadd.f32 %v240, 1.0
    %v242 = vrcp.pop %v241
    %v243 = vmul.f32 1.0, %v242
    %v244 = vmul.f32 %v234, %v243
    %v245 = vld [vmem:[#allocation7] sm:$0xff]
    %v246 = vld [vmem:[#allocation7 + $0x8] sm:$0xff]
    %v247 = vld [vmem:[#allocation7 + $0x10] sm:$0xff]
    %v248 = vld [vmem:[#allocation7 + $0x18] sm:$0xff]
    %v249 = vld [vmem:[#allocation7 + $0x20] sm:$0xff]
    %v250 = vld [vmem:[#allocation7 + $0x28] sm:$0xff]
    %v251 = vld [vmem:[#allocation7 + $0x30] sm:$0xff]
    %v252 = vld [vmem:[#allocation7 + $0x38] sm:$0xff]
    %v253 = vld [vmem:[#allocation7 + $0x40] sm:$0xff]
    %v254 = vld [vmem:[#allocation7 + $0x48] sm:$0xff]
    %v255 = vld [vmem:[#allocation7 + $0x50] sm:$0xff]
    %v256 = vld [vmem:[#allocation7 + $0x58] sm:$0xff]
    %v257 = vld [vmem:[#allocation7 + $0x60] sm:$0xff]
    %v258 = vld [vmem:[#allocation7 + $0x68] sm:$0xff]
    %v259 = vld [vmem:[#allocation7 + $0x70] sm:$0xff]
    %v260 = vld [vmem:[#allocation7 + $0x78] sm:$0xff]
    %v261 = vld [vmem:[#allocation7 + $0x80] sm:$0xff]
    %v262 = vld [vmem:[#allocation7 + $0x88] sm:$0xff]
    %v263 = vld [vmem:[#allocation7 + $0x90] sm:$0xff]
    %v264 = vld [vmem:[#allocation7 + $0x98] sm:$0xff]
    %v265 = vld [vmem:[#allocation7 + $0xa0] sm:$0xff]
    %v266 = vld [vmem:[#allocation7 + $0xa8] sm:$0xff]
    %v267 = vld [vmem:[#allocation7 + $0xb0] sm:$0xff]
    %v268 = vld [vmem:[#allocation7 + $0xb8] sm:$0xff]
    %v269 = vld [vmem:[#allocation7 + $0xc0] sm:$0xff]
    %v270 = vld [vmem:[#allocation7 + $0xc8] sm:$0xff]
    %v271 = vld [vmem:[#allocation7 + $0xd0] sm:$0xff]
    %v272 = vld [vmem:[#allocation7 + $0xd8] sm:$0xff]
    %v273 = vld [vmem:[#allocation7 + $0xe0] sm:$0xff]
    %v274 = vld [vmem:[#allocation7 + $0xe8] sm:$0xff]
    %v275 = vld [vmem:[#allocation7 + $0xf0] sm:$0xff]
    %v276 = vld [vmem:[#allocation7 + $0xf8] sm:$0xff]
    %v277 = vld [vmem:[%s4] sm:$0x3]
    %v279 = vlaneseq
    %v280 = vshrl.u32 %v279, 7
    %v281 = vsub.s32 0, %v280
    %v282 = vrot.slane %v277, %v281
    %v283 = vlaneseq
    %v284 = vshrl.u32 %v283, 7
    %v285 = vsub.s32 1, %v284
    %v286 = vrot.slane %v277, %v285
    %289 = vmatprep.subr.mxu0 %v246
    %290 = vmatpush1.msra.mxu0 %v245
    %291 = vmatprep.subr.mxu0 %v248
    %292 = vmatpush1.msra.mxu0 %v247
    %293 = vmatprep.subr.mxu0 %v250
    %294 = vmatpush1.msra.mxu0 %v249
    %295 = vmatprep.subr.mxu0 %v252
    %296 = vmatpush1.msra.mxu0 %v251
    %297 = vmatprep.subr.mxu0 %v254
    %298 = vmatpush1.msra.mxu0 %v253
    %299 = vmatprep.subr.mxu0 %v256
    %300 = vmatpush1.msra.mxu0 %v255
    %301 = vmatprep.subr.mxu0 %v258
    %302 = vmatpush1.msra.mxu0 %v257
    %303 = vmatprep.subr.mxu0 %v260
    %304 = vmatpush1.msra.mxu0 %v259
    %305 = vmatprep.subr.mxu0 %v262
    %306 = vmatpush1.msra.mxu0 %v261
    %307 = vmatprep.subr.mxu0 %v264
    %308 = vmatpush1.msra.mxu0 %v263
    %309 = vmatprep.subr.mxu0 %v266
    %310 = vmatpush1.msra.mxu0 %v265
    %311 = vmatprep.subr.mxu0 %v268
    %312 = vmatpush1.msra.mxu0 %v267
    %313 = vmatprep.subr.mxu0 %v270
    %314 = vmatpush1.msra.mxu0 %v269
    %315 = vmatprep.subr.mxu0 %v272
    %316 = vmatpush1.msra.mxu0 %v271
    %317 = vmatprep.subr.mxu0 %v274
    %318 = vmatpush1.msra.mxu0 %v273
    %319 = vmatprep.subr.mxu0 %v276
    %320 = vmatpush1.msra.mxu0 %v275
    %321 = vmatprep.subr.mxu0 0.0
    %322 = vmatpush1.msra.mxu0 0.0
    %323 = vmatprep.subr.mxu0 0.0
    %324 = vmatpush1.msra.mxu0 0.0
    %325 = vmatprep.subr.mxu0 0.0
    %326 = vmatpush1.msra.mxu0 0.0
    %327 = vmatprep.subr.mxu0 0.0
    %328 = vmatpush1.msra.mxu0 0.0
    %329 = vmatprep.subr.mxu0 0.0
    %330 = vmatpush1.msra.mxu0 0.0
    %331 = vmatprep.subr.mxu0 0.0
    %332 = vmatpush1.msra.mxu0 0.0
    %333 = vmatprep.subr.mxu0 0.0
    %334 = vmatpush1.msra.mxu0 0.0
    %335 = vmatprep.subr.mxu0 0.0
    %336 = vmatpush1.msra.mxu0 0.0
    %337 = vmatprep.subr.mxu0 0.0
    %338 = vmatpush1.msra.mxu0 0.0
    %339 = vmatprep.subr.mxu0 0.0
    %340 = vmatpush1.msra.mxu0 0.0
    %341 = vmatprep.subr.mxu0 0.0
    %342 = vmatpush1.msra.mxu0 0.0
    %343 = vmatprep.subr.mxu0 0.0
    %344 = vmatpush1.msra.mxu0 0.0
    %345 = vmatprep.subr.mxu0 0.0
    %346 = vmatpush1.msra.mxu0 0.0
    %347 = vmatprep.subr.mxu0 0.0
    %348 = vmatpush1.msra.mxu0 0.0
    %349 = vmatprep.subr.mxu0 0.0
    %350 = vmatpush1.msra.mxu0 0.0
    %351 = vmatprep.subr.mxu0 0.0
    %352 = vmatpush1.msra.mxu0 0.0
    %353 = vmatprep.mubr.f32.mxu0 0.0
    %354 = vmatmul.mubr.f32.gmra.mrb[0].mxu0 %v244
    %v355 = vpop.f32.mrb[0].mxu0
    %v356 = vadd.f32 %v282, %v355
    %v357 = vpop.f32.mrb[0].mxu0
    %v358 = vadd.f32 %v286, %v357
    %359 = vdwg.mxu0
    %v360 = vxor.u32 %v358, 2147483648
    %v361 = vmul.f32 %v360, 1.442695
    %v362 = vpow.pop %v361
    %v363 = vadd.f32 %v362, 1.0
    %v364 = vrcp.pop %v363
    %v365 = vmul.f32 1.0, %v364
    %v366 = vmul.f32 %v356, %v365
    %v367 = vld [vmem:[%s5] sm:$0x1]
    %v368 = vld [vmem:[%s6] sm:$0x1]
    %369 = vadd.xlane.f32.xlu0 %v366
    %v370 = vpop.xlane.xlu0 %369
    %v371 = vmul.f32 %v366, %v366
    %372 = vadd.xlane.f32.xlu0 %v371
    %v373 = vpop.xlane.xlu0 %372
    %v374 = vmul.f32 %v370, 0.03125
    %v375 = vmul.f32 %v373, 0.03125
    %v376 = vmul.f32 %v374, %v374
    %v377 = vsub.f32 %v375, %v376
    %v378 = vmax.f32 %v377, 0.0
    %v379 = vsub.f32 %v366, %v374
    %v380 = vadd.f32 %v378, 1e-05
    %v381 = vrsqrt.pop %v380
    %v382 = vmul.f32 %v379, %v381
    %v384 = vlaneseq
    %v385 = vshrl.u32 %v384, 7
    %v386 = vsub.s32 0, %v385
    %v387 = vrot.slane %v367, %v386
    %v389 = vmul.f32 %v382, %v387
    %v391 = vlaneseq
    %v392 = vshrl.u32 %v391, 7
    %v393 = vsub.s32 0, %v392
    %v394 = vrot.slane %v368, %v393
    %v396 = vadd.f32 %v389, %v394
    %v397 = vld [vmem:[#allocation8] sm:$0xff]
    %v398 = vld [vmem:[#allocation8 + $0x8] sm:$0xff]
    %v399 = vld [vmem:[#allocation8 + $0x10] sm:$0xff]
    %v400 = vld [vmem:[#allocation8 + $0x18] sm:$0xff]
    %v401 = vld [vmem:[#allocation8 + $0x20] sm:$0xff]
    %v402 = vld [vmem:[#allocation8 + $0x28] sm:$0xff]
    %v403 = vld [vmem:[#allocation8 + $0x30] sm:$0xff]
    %v404 = vld [vmem:[#allocation8 + $0x38] sm:$0xff]
    %v405 = vld [vmem:[#allocation8 + $0x40] sm:$0xff]
    %v406 = vld [vmem:[#allocation8 + $0x48] sm:$0xff]
    %v407 = vld [vmem:[#allocation8 + $0x50] sm:$0xff]
    %v408 = vld [vmem:[#allocation8 + $0x58] sm:$0xff]
    %v409 = vld [vmem:[#allocation8 + $0x60] sm:$0xff]
    %v410 = vld [vmem:[#allocation8 + $0x68] sm:$0xff]
    %v411 = vld [vmem:[#allocation8 + $0x70] sm:$0xff]
    %v412 = vld [vmem:[#allocation8 + $0x78] sm:$0xff]
    %v413 = vld [vmem:[#allocation8 + $0x80] sm:$0xff]
    %v414 = vld [vmem:[#allocation8 + $0x88] sm:$0xff]
    %v415 = vld [vmem:[#allocation8 + $0x90] sm:$0xff]
    %v416 = vld [vmem:[#allocation8 + $0x98] sm:$0xff]
    %v417 = vld [vmem:[#allocation8 + $0xa0] sm:$0xff]
    %v418 = vld [vmem:[#allocation8 + $0xa8] sm:$0xff]
    %v419 = vld [vmem:[#allocation8 + $0xb0] sm:$0xff]
    %v420 = vld [vmem:[#allocation8 + $0xb8] sm:$0xff]
    %v421 = vld [vmem:[#allocation8 + $0xc0] sm:$0xff]
    %v422 = vld [vmem:[#allocation8 + $0xc8] sm:$0xff]
    %v423 = vld [vmem:[#allocation8 + $0xd0] sm:$0xff]
    %v424 = vld [vmem:[#allocation8 + $0xd8] sm:$0xff]
    %v425 = vld [vmem:[#allocation8 + $0xe0] sm:$0xff]
    %v426 = vld [vmem:[#allocation8 + $0xe8] sm:$0xff]
    %v427 = vld [vmem:[#allocation8 + $0xf0] sm:$0xff]
    %v428 = vld [vmem:[#allocation8 + $0xf8] sm:$0xff]
    %v429 = vld [vmem:[%s8] sm:$0x3]
    %v431 = vlaneseq
    %v432 = vshrl.u32 %v431, 7
    %v433 = vsub.s32 0, %v432
    %v434 = vrot.slane %v429, %v433
    %v435 = vlaneseq
    %v436 = vshrl.u32 %v435, 7
    %v437 = vsub.s32 1, %v436
    %v438 = vrot.slane %v429, %v437
    %441 = vmatprep.subr.mxu0 %v398
    %442 = vmatpush1.msra.mxu0 %v397
    %443 = vmatprep.subr.mxu0 %v400
    %444 = vmatpush1.msra.mxu0 %v399
    %445 = vmatprep.subr.mxu0 %v402
    %446 = vmatpush1.msra.mxu0 %v401
    %447 = vmatprep.subr.mxu0 %v404
    %448 = vmatpush1.msra.mxu0 %v403
    %449 = vmatprep.subr.mxu0 %v406
    %450 = vmatpush1.msra.mxu0 %v405
    %451 = vmatprep.subr.mxu0 %v408
    %452 = vmatpush1.msra.mxu0 %v407
    %453 = vmatprep.subr.mxu0 %v410
    %454 = vmatpush1.msra.mxu0 %v409
    %455 = vmatprep.subr.mxu0 %v412
    %456 = vmatpush1.msra.mxu0 %v411
    %457 = vmatprep.subr.mxu0 %v414
    %458 = vmatpush1.msra.mxu0 %v413
    %459 = vmatprep.subr.mxu0 %v416
    %460 = vmatpush1.msra.mxu0 %v415
    %461 = vmatprep.subr.mxu0 %v418
    %462 = vmatpush1.msra.mxu0 %v417
    %463 = vmatprep.subr.mxu0 %v420
    %464 = vmatpush1.msra.mxu0 %v419
    %465 = vmatprep.subr.mxu0 %v422
    %466 = vmatpush1.msra.mxu0 %v421
    %467 = vmatprep.subr.mxu0 %v424
    %468 = vmatpush1.msra.mxu0 %v423
    %469 = vmatprep.subr.mxu0 %v426
    %470 = vmatpush1.msra.mxu0 %v425
    %471 = vmatprep.subr.mxu0 %v428
    %472 = vmatpush1.msra.mxu0 %v427
    %473 = vmatprep.subr.mxu0 0.0
    %474 = vmatpush1.msra.mxu0 0.0
    %475 = vmatprep.subr.mxu0 0.0
    %476 = vmatpush1.msra.mxu0 0.0
    %477 = vmatprep.subr.mxu0 0.0
    %478 = vmatpush1.msra.mxu0 0.0
    %479 = vmatprep.subr.mxu0 0.0
    %480 = vmatpush1.msra.mxu0 0.0
    %481 = vmatprep.subr.mxu0 0.0
    %482 = vmatpush1.msra.mxu0 0.0
    %483 = vmatprep.subr.mxu0 0.0
    %484 = vmatpush1.msra.mxu0 0.0
    %485 = vmatprep.subr.mxu0 0.0
    %486 = vmatpush1.msra.mxu0 0.0
    %487 = vmatprep.subr.mxu0 0.0
    %488 = vmatpush1.msra.mxu0 0.0
    %489 = vmatprep.subr.mxu0 0.0
    %490 = vmatpush1.msra.mxu0 0.0
    %491 = vmatprep.subr.mxu0 0.0
    %492 = vmatpush1.msra.mxu0 0.0
    %493 = vmatprep.subr.mxu0 0.0
    %494 = vmatpush1.msra.mxu0 0.0
    %495 = vmatprep.subr.mxu0 0.0
    %496 = vmatpush1.msra.mxu0 0.0
    %497 = vmatprep.subr.mxu0 0.0
    %498 = vmatpush1.msra.mxu0 0.0
    %499 = vmatprep.subr.mxu0 0.0
    %500 = vmatpush1.msra.mxu0 0.0
    %501 = vmatprep.subr.mxu0 0.0
    %502 = vmatpush1.msra.mxu0 0.0
    %503 = vmatprep.subr.mxu0 0.0
    %504 = vmatpush1.msra.mxu0 0.0
    %505 = vmatprep.mubr.f32.mxu0 0.0
    %506 = vmatmul.mubr.f32.gmra.mrb[0].mxu0 %v396
    %v507 = vpop.f32.mrb[0].mxu0
    %v508 = vadd.f32 %v434, %v507
    %v509 = vpop.f32.mrb[0].mxu0
    %v510 = vadd.f32 %v438, %v509
    %511 = vdwg.mxu0
    %v512 = vxor.u32 %v510, 2147483648
    %v513 = vmul.f32 %v512, 1.442695
    %v514 = vpow.pop %v513
    %v515 = vadd.f32 %v514, 1.0
    %v516 = vrcp.pop %v515
    %v517 = vmul.f32 1.0, %v516
    %v518 = vmul.f32 %v508, %v517
    %v519 = vld [vmem:[#allocation10] sm:$0xff]
    %v520 = vld [vmem:[#allocation10 + $0x8] sm:$0xff]
    %v521 = vld [vmem:[#allocation10 + $0x10] sm:$0xff]
    %v522 = vld [vmem:[#allocation10 + $0x18] sm:$0xff]
    %v523 = vld [vmem:[#allocation10 + $0x20] sm:$0xff]
    %v524 = vld [vmem:[#allocation10 + $0x28] sm:$0xff]
    %v525 = vld [vmem:[#allocation10 + $0x30] sm:$0xff]
    %v526 = vld [vmem:[#allocation10 + $0x38] sm:$0xff]
    %v527 = vld [vmem:[#allocation10 + $0x40] sm:$0xff]
    %v528 = vld [vmem:[#allocation10 + $0x48] sm:$0xff]
    %v529 = vld [vmem:[#allocation10 + $0x50] sm:$0xff]
    %v530 = vld [vmem:[#allocation10 + $0x58] sm:$0xff]
    %v531 = vld [vmem:[#allocation10 + $0x60] sm:$0xff]
    %v532 = vld [vmem:[#allocation10 + $0x68] sm:$0xff]
    %v533 = vld [vmem:[#allocation10 + $0x70] sm:$0xff]
    %v534 = vld [vmem:[#allocation10 + $0x78] sm:$0xff]
    %v535 = vld [vmem:[%s10] sm:$0x1]
    %v537 = vlaneseq
    %v538 = vshrl.u32 %v537, 7
    %v539 = vsub.s32 0, %v538
    %v540 = vrot.slane %v535, %v539
    %542 = vmatprep.subr.mxu0 0.0
    %543 = vmatpush1.msra.mxu0 %v519
    %544 = vmatprep.subr.mxu0 0.0
    %545 = vmatpush1.msra.mxu0 %v520
    %546 = vmatprep.subr.mxu0 0.0
    %547 = vmatpush1.msra.mxu0 %v521
    %548 = vmatprep.subr.mxu0 0.0
    %549 = vmatpush1.msra.mxu0 %v522
    %550 = vmatprep.subr.mxu0 0.0
    %551 = vmatpush1.msra.mxu0 %v523
    %552 = vmatprep.subr.mxu0 0.0
    %553 = vmatpush1.msra.mxu0 %v524
    %554 = vmatprep.subr.mxu0 0.0
    %555 = vmatpush1.msra.mxu0 %v525
    %556 = vmatprep.subr.mxu0 0.0
    %557 = vmatpush1.msra.mxu0 %v526
    %558 = vmatprep.subr.mxu0 0.0
    %559 = vmatpush1.msra.mxu0 %v527
    %560 = vmatprep.subr.mxu0 0.0
    %561 = vmatpush1.msra.mxu0 %v528
    %562 = vmatprep.subr.mxu0 0.0
    %563 = vmatpush1.msra.mxu0 %v529
    %564 = vmatprep.subr.mxu0 0.0
    %565 = vmatpush1.msra.mxu0 %v530
    %566 = vmatprep.subr.mxu0 0.0
    %567 = vmatpush1.msra.mxu0 %v531
    %568 = vmatprep.subr.mxu0 0.0
    %569 = vmatpush1.msra.mxu0 %v532
    %570 = vmatprep.subr.mxu0 0.0
    %571 = vmatpush1.msra.mxu0 %v533
    %572 = vmatprep.subr.mxu0 0.0
    %573 = vmatpush1.msra.mxu0 %v534
    %574 = vmatprep.subr.mxu0 0.0
    %575 = vmatpush1.msra.mxu0 0.0
    %576 = vmatprep.subr.mxu0 0.0
    %577 = vmatpush1.msra.mxu0 0.0
    %578 = vmatprep.subr.mxu0 0.0
    %579 = vmatpush1.msra.mxu0 0.0
    %580 = vmatprep.subr.mxu0 0.0
    %581 = vmatpush1.msra.mxu0 0.0
    %582 = vmatprep.subr.mxu0 0.0
    %583 = vmatpush1.msra.mxu0 0.0
    %584 = vmatprep.subr.mxu0 0.0
    %585 = vmatpush1.msra.mxu0 0.0
    %586 = vmatprep.subr.mxu0 0.0
    %587 = vmatpush1.msra.mxu0 0.0
    %588 = vmatprep.subr.mxu0 0.0
    %589 = vmatpush1.msra.mxu0 0.0
    %590 = vmatprep.subr.mxu0 0.0
    %591 = vmatpush1.msra.mxu0 0.0
    %592 = vmatprep.subr.mxu0 0.0
    %593 = vmatpush1.msra.mxu0 0.0
    %594 = vmatprep.subr.mxu0 0.0
    %595 = vmatpush1.msra.mxu0 0.0
    %596 = vmatprep.subr.mxu0 0.0
    %597 = vmatpush1.msra.mxu0 0.0
    %598 = vmatprep.subr.mxu0 0.0
    %599 = vmatpush1.msra.mxu0 0.0
    %600 = vmatprep.subr.mxu0 0.0
    %601 = vmatpush1.msra.mxu0 0.0
    %602 = vmatprep.subr.mxu0 0.0
    %603 = vmatpush1.msra.mxu0 0.0
    %604 = vmatprep.subr.mxu0 0.0
    %605 = vmatpush1.msra.mxu0 0.0
    %606 = vmatprep.mubr.f32.mxu0 0.0
    %607 = vmatmul.mubr.f32.gmra.mrb[0].mxu0 %v518
    %v608 = vpop.f32.mrb[0].mxu0
    %v609 = vadd.f32 %v540, %v608
    %v610 = vpop.f32.mrb[0].mxu0
    %611 = vdwg.mxu0
    %v612 = vadd.f32 %v609, %v366
    %s613 = scalar_lea.vmem %s5, 1
    %v614 = vld [vmem:[%s613] sm:$0x1]
    %s615 = scalar_lea.vmem %s6, 1
    %v616 = vld [vmem:[%s615] sm:$0x1]
    %617 = vadd.xlane.f32.xlu0 %v612
    %v618 = vpop.xlane.xlu0 %617
    %v619 = vmul.f32 %v612, %v612
    %620 = vadd.xlane.f32.xlu0 %v619
    %v621 = vpop.xlane.xlu0 %620
    %v622 = vmul.f32 %v618, 0.03125
    %v623 = vmul.f32 %v621, 0.03125
    %v624 = vmul.f32 %v622, %v622
    %v625 = vsub.f32 %v623, %v624
    %v626 = vmax.f32 %v625, 0.0
    %v627 = vsub.f32 %v612, %v622
    %v628 = vadd.f32 %v626, 1e-05
    %v629 = vrsqrt.pop %v628
    %v630 = vmul.f32 %v627, %v629
    %v632 = vlaneseq
    %v633 = vshrl.u32 %v632, 7
    %v634 = vsub.s32 0, %v633
    %v635 = vrot.slane %v614, %v634
    %v637 = vmul.f32 %v630, %v635
    %v639 = vlaneseq
    %v640 = vshrl.u32 %v639, 7
    %v641 = vsub.s32 0, %v640
    %v642 = vrot.slane %v616, %v641
    %v644 = vadd.f32 %v637, %v642
    %s645 = scalar_lea.vmem [#allocation8], 256
    %v646 = vld [vmem:[%s645] sm:$0xff]
    %v647 = vld [vmem:[%s645 + $0x8] sm:$0xff]
    %v648 = vld [vmem:[%s645 + $0x10] sm:$0xff]
    %v649 = vld [vmem:[%s645 + $0x18] sm:$0xff]
    %v650 = vld [vmem:[%s645 + $0x20] sm:$0xff]
    %v651 = vld [vmem:[%s645 + $0x28] sm:$0xff]
    %v652 = vld [vmem:[%s645 + $0x30] sm:$0xff]
    %v653 = vld [vmem:[%s645 + $0x38] sm:$0xff]
    %v654 = vld [vmem:[%s645 + $0x40] sm:$0xff]
    %v655 = vld [vmem:[%s645 + $0x48] sm:$0xff]
    %v656 = vld [vmem:[%s645 + $0x50] sm:$0xff]
    %v657 = vld [vmem:[%s645 + $0x58] sm:$0xff]
    %v658 = vld [vmem:[%s645 + $0x60] sm:$0xff]
    %v659 = vld [vmem:[%s645 + $0x68] sm:$0xff]
    %v660 = vld [vmem:[%s645 + $0x70] sm:$0xff]
    %v661 = vld [vmem:[%s645 + $0x78] sm:$0xff]
    %v662 = vld [vmem:[%s645 + $0x80] sm:$0xff]
    %v663 = vld [vmem:[%s645 + $0x88] sm:$0xff]
    %v664 = vld [vmem:[%s645 + $0x90] sm:$0xff]
    %v665 = vld [vmem:[%s645 + $0x98] sm:$0xff]
    %v666 = vld [vmem:[%s645 + $0xa0] sm:$0xff]
    %v667 = vld [vmem:[%s645 + $0xa8] sm:$0xff]
    %v668 = vld [vmem:[%s645 + $0xb0] sm:$0xff]
    %v669 = vld [vmem:[%s645 + $0xb8] sm:$0xff]
    %v670 = vld [vmem:[%s645 + $0xc0] sm:$0xff]
    %v671 = vld [vmem:[%s645 + $0xc8] sm:$0xff]
    %v672 = vld [vmem:[%s645 + $0xd0] sm:$0xff]
    %v673 = vld [vmem:[%s645 + $0xd8] sm:$0xff]
    %v674 = vld [vmem:[%s645 + $0xe0] sm:$0xff]
    %v675 = vld [vmem:[%s645 + $0xe8] sm:$0xff]
    %v676 = vld [vmem:[%s645 + $0xf0] sm:$0xff]
    %v677 = vld [vmem:[%s645 + $0xf8] sm:$0xff]
    %s678 = scalar_lea.vmem %s8, 2
    %v679 = vld [vmem:[%s678] sm:$0x3]
    %v681 = vlaneseq
    %v682 = vshrl.u32 %v681, 7
    %v683 = vsub.s32 0, %v682
    %v684 = vrot.slane %v679, %v683
    %v685 = vlaneseq
    %v686 = vshrl.u32 %v685, 7
    %v687 = vsub.s32 1, %v686
    %v688 = vrot.slane %v679, %v687
    %691 = vmatprep.subr.mxu0 %v647
    %692 = vmatpush1.msra.mxu0 %v646
    %693 = vmatprep.subr.mxu0 %v649
    %694 = vmatpush1.msra.mxu0 %v648
    %695 = vmatprep.subr.mxu0 %v651
    %696 = vmatpush1.msra.mxu0 %v650
    %697 = vmatprep.subr.mxu0 %v653
    %698 = vmatpush1.msra.mxu0 %v652
    %699 = vmatprep.subr.mxu0 %v655
    %700 = vmatpush1.msra.mxu0 %v654
    %701 = vmatprep.subr.mxu0 %v657
    %702 = vmatpush1.msra.mxu0 %v656
    %703 = vmatprep.subr.mxu0 %v659
    %704 = vmatpush1.msra.mxu0 %v658
    %705 = vmatprep.subr.mxu0 %v661
    %706 = vmatpush1.msra.mxu0 %v660
    %707 = vmatprep.subr.mxu0 %v663
    %708 = vmatpush1.msra.mxu0 %v662
    %709 = vmatprep.subr.mxu0 %v665
    %710 = vmatpush1.msra.mxu0 %v664
    %711 = vmatprep.subr.mxu0 %v667
    %712 = vmatpush1.msra.mxu0 %v666
    %713 = vmatprep.subr.mxu0 %v669
    %714 = vmatpush1.msra.mxu0 %v668
    %715 = vmatprep.subr.mxu0 %v671
    %716 = vmatpush1.msra.mxu0 %v670
    %717 = vmatprep.subr.mxu0 %v673
    %718 = vmatpush1.msra.mxu0 %v672
    %719 = vmatprep.subr.mxu0 %v675
    %720 = vmatpush1.msra.mxu0 %v674
    %721 = vmatprep.subr.mxu0 %v677
    %722 = vmatpush1.msra.mxu0 %v676
    %723 = vmatprep.subr.mxu0 0.0
    %724 = vmatpush1.msra.mxu0 0.0
    %725 = vmatprep.subr.mxu0 0.0
    %726 = vmatpush1.msra.mxu0 0.0
    %727 = vmatprep.subr.mxu0 0.0
    %728 = vmatpush1.msra.mxu0 0.0
    %729 = vmatprep.subr.mxu0 0.0
    %730 = vmatpush1.msra.mxu0 0.0
    %731 = vmatprep.subr.mxu0 0.0
    %732 = vmatpush1.msra.mxu0 0.0
    %733 = vmatprep.subr.mxu0 0.0
    %734 = vmatpush1.msra.mxu0 0.0
    %735 = vmatprep.subr.mxu0 0.0
    %736 = vmatpush1.msra.mxu0 0.0
    %737 = vmatprep.subr.mxu0 0.0
    %738 = vmatpush1.msra.mxu0 0.0
    %739 = vmatprep.subr.mxu0 0.0
    %740 = vmatpush1.msra.mxu0 0.0
    %741 = vmatprep.subr.mxu0 0.0
    %742 = vmatpush1.msra.mxu0 0.0
    %743 = vmatprep.subr.mxu0 0.0
    %744 = vmatpush1.msra.mxu0 0.0
    %745 = vmatprep.subr.mxu0 0.0
    %746 = vmatpush1.msra.mxu0 0.0
    %747 = vmatprep.subr.mxu0 0.0
    %748 = vmatpush1.msra.mxu0 0.0
    %749 = vmatprep.subr.mxu0 0.0
    %750 = vmatpush1.msra.mxu0 0.0
    %751 = vmatprep.subr.mxu0 0.0
    %752 = vmatpush1.msra.mxu0 0.0
    %753 = vmatprep.subr.mxu0 0.0
    %754 = vmatpush1.msra.mxu0 0.0
    %755 = vmatprep.mubr.f32.mxu0 0.0
    %756 = vmatmul.mubr.f32.gmra.mrb[0].mxu0 %v644
    %v757 = vpop.f32.mrb[0].mxu0
    %v758 = vadd.f32 %v684, %v757
    %v759 = vpop.f32.mrb[0].mxu0
    %v760 = vadd.f32 %v688, %v759
    %761 = vdwg.mxu0
    %v762 = vxor.u32 %v760, 2147483648
    %v763 = vmul.f32 %v762, 1.442695
    %v764 = vpow.pop %v763
    %v765 = vadd.f32 %v764, 1.0
    %v766 = vrcp.pop %v765
    %v767 = vmul.f32 1.0, %v766
    %v768 = vmul.f32 %v758, %v767
    %s769 = scalar_lea.vmem [#allocation10], 128
    %v770 = vld [vmem:[%s769] sm:$0xff]
    %v771 = vld [vmem:[%s769 + $0x8] sm:$0xff]
    %v772 = vld [vmem:[%s769 + $0x10] sm:$0xff]
    %v773 = vld [vmem:[%s769 + $0x18] sm:$0xff]
    %v774 = vld [vmem:[%s769 + $0x20] sm:$0xff]
    %v775 = vld [vmem:[%s769 + $0x28] sm:$0xff]
    %v776 = vld [vmem:[%s769 + $0x30] sm:$0xff]
    %v777 = vld [vmem:[%s769 + $0x38] sm:$0xff]
    %v778 = vld [vmem:[%s769 + $0x40] sm:$0xff]
    %v779 = vld [vmem:[%s769 + $0x48] sm:$0xff]
    %v780 = vld [vmem:[%s769 + $0x50] sm:$0xff]
    %v781 = vld [vmem:[%s769 + $0x58] sm:$0xff]
    %v782 = vld [vmem:[%s769 + $0x60] sm:$0xff]
    %v783 = vld [vmem:[%s769 + $0x68] sm:$0xff]
    %v784 = vld [vmem:[%s769 + $0x70] sm:$0xff]
    %v785 = vld [vmem:[%s769 + $0x78] sm:$0xff]
    %s786 = scalar_lea.vmem %s10, 1
    %v787 = vld [vmem:[%s786] sm:$0x1]
    %v789 = vlaneseq
    %v790 = vshrl.u32 %v789, 7
    %v791 = vsub.s32 0, %v790
    %v792 = vrot.slane %v787, %v791
    %794 = vmatprep.subr.mxu0 0.0
    %795 = vmatpush1.msra.mxu0 %v770
    %796 = vmatprep.subr.mxu0 0.0
    %797 = vmatpush1.msra.mxu0 %v771
    %798 = vmatprep.subr.mxu0 0.0
    %799 = vmatpush1.msra.mxu0 %v772
    %800 = vmatprep.subr.mxu0 0.0
    %801 = vmatpush1.msra.mxu0 %v773
    %802 = vmatprep.subr.mxu0 0.0
    %803 = vmatpush1.msra.mxu0 %v774
    %804 = vmatprep.subr.mxu0 0.0
    %805 = vmatpush1.msra.mxu0 %v775
    %806 = vmatprep.subr.mxu0 0.0
    %807 = vmatpush1.msra.mxu0 %v776
    %808 = vmatprep.subr.mxu0 0.0
    %809 = vmatpush1.msra.mxu0 %v777
    %810 = vmatprep.subr.mxu0 0.0
    %811 = vmatpush1.msra.mxu0 %v778
    %812 = vmatprep.subr.mxu0 0.0
    %813 = vmatpush1.msra.mxu0 %v779
    %814 = vmatprep.subr.mxu0 0.0
    %815 = vmatpush1.msra.mxu0 %v780
    %816 = vmatprep.subr.mxu0 0.0
    %817 = vmatpush1.msra.mxu0 %v781
    %818 = vmatprep.subr.mxu0 0.0
    %819 = vmatpush1.msra.mxu0 %v782
    %820 = vmatprep.subr.mxu0 0.0
    %821 = vmatpush1.msra.mxu0 %v783
    %822 = vmatprep.subr.mxu0 0.0
    %823 = vmatpush1.msra.mxu0 %v784
    %824 = vmatprep.subr.mxu0 0.0
    %825 = vmatpush1.msra.mxu0 %v785
    %826 = vmatprep.subr.mxu0 0.0
    %827 = vmatpush1.msra.mxu0 0.0
    %828 = vmatprep.subr.mxu0 0.0
    %829 = vmatpush1.msra.mxu0 0.0
    %830 = vmatprep.subr.mxu0 0.0
    %831 = vmatpush1.msra.mxu0 0.0
    %832 = vmatprep.subr.mxu0 0.0
    %833 = vmatpush1.msra.mxu0 0.0
    %834 = vmatprep.subr.mxu0 0.0
    %835 = vmatpush1.msra.mxu0 0.0
    %836 = vmatprep.subr.mxu0 0.0
    %837 = vmatpush1.msra.mxu0 0.0
    %838 = vmatprep.subr.mxu0 0.0
    %839 = vmatpush1.msra.mxu0 0.0
    %840 = vmatprep.subr.mxu0 0.0
    %841 = vmatpush1.msra.mxu0 0.0
    %842 = vmatprep.subr.mxu0 0.0
    %843 = vmatpush1.msra.mxu0 0.0
    %844 = vmatprep.subr.mxu0 0.0
    %845 = vmatpush1.msra.mxu0 0.0
    %846 = vmatprep.subr.mxu0 0.0
    %847 = vmatpush1.msra.mxu0 0.0
    %848 = vmatprep.subr.mxu0 0.0
    %849 = vmatpush1.msra.mxu0 0.0
    %850 = vmatprep.subr.mxu0 0.0
    %851 = vmatpush1.msra.mxu0 0.0
    %852 = vmatprep.subr.mxu0 0.0
    %853 = vmatpush1.msra.mxu0 0.0
    %854 = vmatprep.subr.mxu0 0.0
    %855 = vmatpush1.msra.mxu0 0.0
    %856 = vmatprep.subr.mxu0 0.0
    %857 = vmatpush1.msra.mxu0 0.0
    %858 = vmatprep.mubr.f32.mxu0 0.0
    %859 = vmatmul.mubr.f32.gmra.mrb[0].mxu0 %v768
    %v860 = vpop.f32.mrb[0].mxu0
    %v861 = vadd.f32 %v792, %v860
    %v862 = vpop.f32.mrb[0].mxu0
    %863 = vdwg.mxu0
    %v864 = vadd.f32 %v861, %v612
    %v865 = vld [vmem:[%s11] sm:$0x1]
    %v866 = vld [vmem:[%s12] sm:$0x1]
    %867 = vadd.xlane.f32.xlu0 %v864
    %v868 = vpop.xlane.xlu0 %867
    %v869 = vmul.f32 %v864, %v864
    %870 = vadd.xlane.f32.xlu0 %v869
    %v871 = vpop.xlane.xlu0 %870
    %v872 = vmul.f32 %v868, 0.03125
    %v873 = vmul.f32 %v871, 0.03125
    %v874 = vmul.f32 %v872, %v872
    %v875 = vsub.f32 %v873, %v874
    %v876 = vmax.f32 %v875, 0.0
    %v877 = vsub.f32 %v864, %v872
    %v878 = vadd.f32 %v876, 1e-05
    %v879 = vrsqrt.pop %v878
    %v880 = vmul.f32 %v877, %v879
    %v882 = vlaneseq
    %v883 = vshrl.u32 %v882, 7
    %v884 = vsub.s32 0, %v883
    %v885 = vrot.slane %v865, %v884
    %v887 = vmul.f32 %v880, %v885
    %v889 = vlaneseq
    %v890 = vshrl.u32 %v889, 7
    %v891 = vsub.s32 0, %v890
    %v892 = vrot.slane %v866, %v891
    %v894 = vadd.f32 %v887, %v892
    %v895 = vld [vmem:[#allocation11] sm:$0xff]
    %v896 = vld [vmem:[#allocation11 + $0x8] sm:$0xff]
    %v897 = vld [vmem:[#allocation11 + $0x10] sm:$0xff]
    %v898 = vld [vmem:[#allocation11 + $0x18] sm:$0xff]
    %v899 = vld [vmem:[#allocation11 + $0x20] sm:$0xff]
    %v900 = vld [vmem:[#allocation11 + $0x28] sm:$0xff]
    %v901 = vld [vmem:[#allocation11 + $0x30] sm:$0xff]
    %v902 = vld [vmem:[#allocation11 + $0x38] sm:$0xff]
    %v903 = vld [vmem:[#allocation11 + $0x40] sm:$0xff]
    %v904 = vld [vmem:[#allocation11 + $0x48] sm:$0xff]
    %v905 = vld [vmem:[#allocation11 + $0x50] sm:$0xff]
    %v906 = vld [vmem:[#allocation11 + $0x58] sm:$0xff]
    %v907 = vld [vmem:[#allocation11 + $0x60] sm:$0xff]
    %v908 = vld [vmem:[#allocation11 + $0x68] sm:$0xff]
    %v909 = vld [vmem:[#allocation11 + $0x70] sm:$0xff]
    %v910 = vld [vmem:[#allocation11 + $0x78] sm:$0xff]
    %v911 = vld [vmem:[#allocation11 + $0x80] sm:$0xff]
    %v912 = vld [vmem:[#allocation11 + $0x88] sm:$0xff]
    %v913 = vld [vmem:[#allocation11 + $0x90] sm:$0xff]
    %v914 = vld [vmem:[#allocation11 + $0x98] sm:$0xff]
    %v915 = vld [vmem:[#allocation11 + $0xa0] sm:$0xff]
    %v916 = vld [vmem:[#allocation11 + $0xa8] sm:$0xff]
    %v917 = vld [vmem:[#allocation11 + $0xb0] sm:$0xff]
    %v918 = vld [vmem:[#allocation11 + $0xb8] sm:$0xff]
    %v919 = vld [vmem:[#allocation11 + $0xc0] sm:$0xff]
    %v920 = vld [vmem:[#allocation11 + $0xc8] sm:$0xff]
    %v921 = vld [vmem:[#allocation11 + $0xd0] sm:$0xff]
    %v922 = vld [vmem:[#allocation11 + $0xd8] sm:$0xff]
    %v923 = vld [vmem:[#allocation11 + $0xe0] sm:$0xff]
    %v924 = vld [vmem:[#allocation11 + $0xe8] sm:$0xff]
    %v925 = vld [vmem:[#allocation11 + $0xf0] sm:$0xff]
    %v926 = vld [vmem:[#allocation11 + $0xf8] sm:$0xff]
    %v927 = vld [vmem:[%s14] sm:$0x3]
    %v929 = vlaneseq
    %v930 = vshrl.u32 %v929, 7
    %v931 = vsub.s32 0, %v930
    %v932 = vrot.slane %v927, %v931
    %v933 = vlaneseq
    %v934 = vshrl.u32 %v933, 7
    %v935 = vsub.s32 1, %v934
    %v936 = vrot.slane %v927, %v935
    %939 = vmatprep.subr.mxu0 %v896
    %940 = vmatpush1.msra.mxu0 %v895
    %941 = vmatprep.subr.mxu0 %v898
    %942 = vmatpush1.msra.mxu0 %v897
    %943 = vmatprep.subr.mxu0 %v900
    %944 = vmatpush1.msra.mxu0 %v899
    %945 = vmatprep.subr.mxu0 %v902
    %946 = vmatpush1.msra.mxu0 %v901
    %947 = vmatprep.subr.mxu0 %v904
    %948 = vmatpush1.msra.mxu0 %v903
    %949 = vmatprep.subr.mxu0 %v906
    %950 = vmatpush1.msra.mxu0 %v905
    %951 = vmatprep.subr.mxu0 %v908
    %952 = vmatpush1.msra.mxu0 %v907
    %953 = vmatprep.subr.mxu0 %v910
    %954 = vmatpush1.msra.mxu0 %v909
    %955 = vmatprep.subr.mxu0 %v912
    %956 = vmatpush1.msra.mxu0 %v911
    %957 = vmatprep.subr.mxu0 %v914
    %958 = vmatpush1.msra.mxu0 %v913
    %959 = vmatprep.subr.mxu0 %v916
    %960 = vmatpush1.msra.mxu0 %v915
    %961 = vmatprep.subr.mxu0 %v918
    %962 = vmatpush1.msra.mxu0 %v917
    %963 = vmatprep.subr.mxu0 %v920
    %964 = vmatpush1.msra.mxu0 %v919
    %965 = vmatprep.subr.mxu0 %v922
    %966 = vmatpush1.msra.mxu0 %v921
    %967 = vmatprep.subr.mxu0 %v924
    %968 = vmatpush1.msra.mxu0 %v923
    %969 = vmatprep.subr.mxu0 %v926
    %970 = vmatpush1.msra.mxu0 %v925
    %971 = vmatprep.subr.mxu0 0.0
    %972 = vmatpush1.msra.mxu0 0.0
    %973 = vmatprep.subr.mxu0 0.0
    %974 = vmatpush1.msra.mxu0 0.0
    %975 = vmatprep.subr.mxu0 0.0
    %976 = vmatpush1.msra.mxu0 0.0
    %977 = vmatprep.subr.mxu0 0.0
    %978 = vmatpush1.msra.mxu0 0.0
    %979 = vmatprep.subr.mxu0 0.0
    %980 = vmatpush1.msra.mxu0 0.0
    %981 = vmatprep.subr.mxu0 0.0
    %982 = vmatpush1.msra.mxu0 0.0
    %983 = vmatprep.subr.mxu0 0.0
    %984 = vmatpush1.msra.mxu0 0.0
    %985 = vmatprep.subr.mxu0 0.0
    %986 = vmatpush1.msra.mxu0 0.0
    %987 = vmatprep.subr.mxu0 0.0
    %988 = vmatpush1.msra.mxu0 0.0
    %989 = vmatprep.subr.mxu0 0.0
    %990 = vmatpush1.msra.mxu0 0.0
    %991 = vmatprep.subr.mxu0 0.0
    %992 = vmatpush1.msra.mxu0 0.0
    %993 = vmatprep.subr.mxu0 0.0
    %994 = vmatpush1.msra.mxu0 0.0
    %995 = vmatprep.subr.mxu0 0.0
    %996 = vmatpush1.msra.mxu0 0.0
    %997 = vmatprep.subr.mxu0 0.0
    %998 = vmatpush1.msra.mxu0 0.0
    %999 = vmatprep.subr.mxu0 0.0
    %1000 = vmatpush1.msra.mxu0 0.0
    %1001 = vmatprep.subr.mxu0 0.0
    %1002 = vmatpush1.msra.mxu0 0.0
    %1003 = vmatprep.mubr.f32.mxu0 0.0
    %1004 = vmatmul.mubr.f32.gmra.mrb[0].mxu0 %v894
    %v1005 = vpop.f32.mrb[0].mxu0
    %v1006 = vadd.f32 %v932, %v1005
    %v1007 = vpop.f32.mrb[0].mxu0
    %v1008 = vadd.f32 %v936, %v1007
    %1009 = vdwg.mxu0
    %v1010 = vxor.u32 %v1008, 2147483648
    %v1011 = vmul.f32 %v1010, 1.442695
    %v1012 = vpow.pop %v1011
    %v1013 = vadd.f32 %v1012, 1.0
    %v1014 = vrcp.pop %v1013
    %v1015 = vmul.f32 1.0, %v1014
    %v1016 = vmul.f32 %v1006, %v1015
    %v1017 = vld [vmem:[#allocation13] sm:$0xff]
    %v1018 = vld [vmem:[#allocation13 + $0x8] sm:$0xff]
    %v1019 = vld [vmem:[#allocation13 + $0x10] sm:$0xff]
    %v1020 = vld [vmem:[#allocation13 + $0x18] sm:$0xff]
    %v1021 = vld [vmem:[#allocation13 + $0x20] sm:$0xff]
    %v1022 = vld [vmem:[#allocation13 + $0x28] sm:$0xff]
    %v1023 = vld [vmem:[#allocation13 + $0x30] sm:$0xff]
    %v1024 = vld [vmem:[#allocation13 + $0x38] sm:$0xff]
    %v1025 = vld [vmem:[#allocation13 + $0x40] sm:$0xff]
    %v1026 = vld [vmem:[#allocation13 + $0x48] sm:$0xff]
    %v1027 = vld [vmem:[#allocation13 + $0x50] sm:$0xff]
    %v1028 = vld [vmem:[#allocation13 + $0x58] sm:$0xff]
    %v1029 = vld [vmem:[#allocation13 + $0x60] sm:$0xff]
    %v1030 = vld [vmem:[#allocation13 + $0x68] sm:$0xff]
    %v1031 = vld [vmem:[#allocation13 + $0x70] sm:$0xff]
    %v1032 = vld [vmem:[#allocation13 + $0x78] sm:$0xff]
    %v1033 = vld [vmem:[%s16] sm:$0x1]
    %v1035 = vlaneseq
    %v1036 = vshrl.u32 %v1035, 7
    %v1037 = vsub.s32 0, %v1036
    %v1038 = vrot.slane %v1033, %v1037
    %1040 = vmatprep.subr.mxu0 0.0
    %1041 = vmatpush1.msra.mxu0 %v1017
    %1042 = vmatprep.subr.mxu0 0.0
    %1043 = vmatpush1.msra.mxu0 %v1018
    %1044 = vmatprep.subr.mxu0 0.0
    %1045 = vmatpush1.msra.mxu0 %v1019
    %1046 = vmatprep.subr.mxu0 0.0
    %1047 = vmatpush1.msra.mxu0 %v1020
    %1048 = vmatprep.subr.mxu0 0.0
    %1049 = vmatpush1.msra.mxu0 %v1021
    %1050 = vmatprep.subr.mxu0 0.0
    %1051 = vmatpush1.msra.mxu0 %v1022
    %1052 = vmatprep.subr.mxu0 0.0
    %1053 = vmatpush1.msra.mxu0 %v1023
    %1054 = vmatprep.subr.mxu0 0.0
    %1055 = vmatpush1.msra.mxu0 %v1024
    %1056 = vmatprep.subr.mxu0 0.0
    %1057 = vmatpush1.msra.mxu0 %v1025
    %1058 = vmatprep.subr.mxu0 0.0
    %1059 = vmatpush1.msra.mxu0 %v1026
    %1060 = vmatprep.subr.mxu0 0.0
    %1061 = vmatpush1.msra.mxu0 %v1027
    %1062 = vmatprep.subr.mxu0 0.0
    %1063 = vmatpush1.msra.mxu0 %v1028
    %1064 = vmatprep.subr.mxu0 0.0
    %1065 = vmatpush1.msra.mxu0 %v1029
    %1066 = vmatprep.subr.mxu0 0.0
    %1067 = vmatpush1.msra.mxu0 %v1030
    %1068 = vmatprep.subr.mxu0 0.0
    %1069 = vmatpush1.msra.mxu0 %v1031
    %1070 = vmatprep.subr.mxu0 0.0
    %1071 = vmatpush1.msra.mxu0 %v1032
    %1072 = vmatprep.subr.mxu0 0.0
    %1073 = vmatpush1.msra.mxu0 0.0
    %1074 = vmatprep.subr.mxu0 0.0
    %1075 = vmatpush1.msra.mxu0 0.0
    %1076 = vmatprep.subr.mxu0 0.0
    %1077 = vmatpush1.msra.mxu0 0.0
    %1078 = vmatprep.subr.mxu0 0.0
    %1079 = vmatpush1.msra.mxu0 0.0
    %1080 = vmatprep.subr.mxu0 0.0
    %1081 = vmatpush1.msra.mxu0 0.0
    %1082 = vmatprep.subr.mxu0 0.0
    %1083 = vmatpush1.msra.mxu0 0.0
    %1084 = vmatprep.subr.mxu0 0.0
    %1085 = vmatpush1.msra.mxu0 0.0
    %1086 = vmatprep.subr.mxu0 0.0
    %1087 = vmatpush1.msra.mxu0 0.0
    %1088 = vmatprep.subr.mxu0 0.0
    %1089 = vmatpush1.msra.mxu0 0.0
    %1090 = vmatprep.subr.mxu0 0.0
    %1091 = vmatpush1.msra.mxu0 0.0
    %1092 = vmatprep.subr.mxu0 0.0
    %1093 = vmatpush1.msra.mxu0 0.0
    %1094 = vmatprep.subr.mxu0 0.0
    %1095 = vmatpush1.msra.mxu0 0.0
    %1096 = vmatprep.subr.mxu0 0.0
    %1097 = vmatpush1.msra.mxu0 0.0
    %1098 = vmatprep.subr.mxu0 0.0
    %1099 = vmatpush1.msra.mxu0 0.0
    %1100 = vmatprep.subr.mxu0 0.0
    %1101 = vmatpush1.msra.mxu0 0.0
    %1102 = vmatprep.subr.mxu0 0.0
    %1103 = vmatpush1.msra.mxu0 0.0
    %1104 = vmatprep.mubr.f32.mxu0 0.0
    %1105 = vmatmul.mubr.f32.gmra.mrb[0].mxu0 %v1016
    %v1106 = vpop.f32.mrb[0].mxu0
    %v1107 = vadd.f32 %v1038, %v1106
    %v1108 = vpop.f32.mrb[0].mxu0
    %1109 = vdwg.mxu0
    %v1110 = vlaneseq
    %v1111 = vand.u32 %v1110, 127
    %vm1112 = vcmp.ge.s32.totalorder %v1111, 10
    %vm1113 = vcmp.lt.s32.totalorder %v1111, 12
    %vm1114 = vmand %vm1112, %vm1113
    %v1115 = vand.u32 2147483647, %v1107
    %v1116 = vsub.f32 0.0, %v1115
    %v1117 = vmul.f32 %v1116, 1.442695
    %v1118 = vpow.pop %v1117
    %v1119 = vadd.f32 %v1118, 1.0
    %v1120 = vlog2.pop %v1119
    %v1121 = vmul.f32 %v1120, 0.6931472
    %v1122 = vmul.f32 -0.5, %v1118
    %v1123 = vadd.f32 %v1122, 1.0
    %v1124 = vmul.f32 %v1123, %v1118
    %v1125 = vand.u32 2147483647, %v1118
    %vm1126 = vcmp.lt.f32.partialorder %v1125, 0.0004427343
    %v1127 = vsel %vm1126, %v1124, %v1121
    %v1128 = vmax.f32 %v1107, 0.0
    %v1129 = vadd.f32 %v1127, %v1128
    %v1130 = vadd.f32 %v1129, 1e-06
    %v1131 = vsel %vm1114, %v1130, %v1107
    %1132 = vst [vmem:[#allocation14] sm:$0xff] %v1131
    // Predicated region
    $region98: #{tpu_custom_call.1} parent=1 // pred_check
      _
    $region99: #{tpu_custom_call.1} parent=1 // pred_check_branch
      %1134 = sbr.rel (0) target = $region101
    $region100: #{tpu_custom_call.1} parent=1 // pred_region
      %s1136 = ssub.s32 128, 128
      %1137 = vsyncadd [#allocation4], %s1136
      %s1139 = sshll.u32 [#allocation14], 4
      %s1140 = int_to_ptr.vmem [resolvable:$true] %s1139
      %1142 = dma.vmem_to_hbm [thread:$0]  %s1140, 128, %s17, [#allocation4]
    $region101: #{tpu_custom_call.1} parent=1 // pred_fallthru
      _
    // Predicated region
    $region102: #{tpu_custom_call.1} parent=1 // pred_check
      _
    $region103: #{tpu_custom_call.1} parent=1 // pred_check_branch
      %1144 = sbr.rel (0) target = $region105
    $region104: #{tpu_custom_call.1} parent=1 // pred_region
      %1145 = dma.done [#allocation4], 128
    $region105: #{tpu_custom_call.1} parent=1 // pred_fallthru
      _
    %1146 = vsyncpa [#allocation3], 1
    %1147 = vsyncpa [#allocation6], 1
    %1148 = vsyncpa [#allocation9], 1
    %1149 = vsyncpa [#allocation12], 1
    %1150 = vsyncpa [#allocation4], 1

</llo_original>
